<compile_context>
chip_gen: v7x
topology: tpu7x:2x2x1
jax: 0.10.0
libtpu: 0.0.40
codegen_flags: <defaults>
</compile_context>

<pallas_src>
import jax
import jax.numpy as jnp
from jax.experimental import pallas as pl
from jax.experimental.pallas import tpu as pltpu


def _round_up(v, m):
    return (v + m - 1) // m * m


def _vmem_budget_bytes():
    """Generation-aware VMEM numbers (review items 6/7: no hard-coded 40/48 MiB)."""
    try:
        cap = int(pltpu.get_tpu_info().vmem_capacity_bytes)
    except Exception:
        cap = 64 * 1024 * 1024                 # conservative: v7x per-TC VMEM
    limit = (cap * 5) // 8                     # 40 MiB on v7x, 80 MiB on v5e/v6e
    budget = max(limit - 8 * 1024 * 1024, 16 * 1024 * 1024)
    return budget, limit


def _pick_tr(R, K, Ncols, budget):
    """Largest row tile whose (double-buffered) blocks fit the VMEM budget."""
    Kp = _round_up(max(K, 1), 128)             # lane-padded x-row width in VMEM
    Np = _round_up(max(Ncols, 1), 128)
    # Grid-invariant operands (weight + packed vectors).  Pallas still keeps
    # two buffers for them, so count 2x (see note on pl.Buffered(1) above).
    fixed = 2 * 4 * (_round_up(K, 8) * Np) + 2 * 4 * (8 * Np)
    for cand in (4096, 2048, 1024, 512, 256, 128, 64, 32, 16, 8):
        # 2x-buffered x block + 2x-buffered out block + ~2 live f32 temps.
        need = fixed + 2 * 4 * cand * Kp + 2 * 4 * cand * Np + 2 * 4 * cand * Np
        if need <= budget:
            return cand
    return 8


# ----------------------------------------------------------------------------
# Pass 1: relu(x @ w + b) -> per-block column sum (row 0) / sum-of-squares (row 1)
# ----------------------------------------------------------------------------
def _mm_bias_relu_stats_kernel(x_ref, w_ref, b_ref, stats_ref):
    y = jnp.dot(x_ref[...], w_ref[...], preferred_element_type=jnp.float32)
    y = jnp.maximum(y + b_ref[...], 0.0)
    tr = y.shape[0]
    # Column reductions on the MXU (one-hot selector rows) instead of a
    # sublane jnp.sum -- keeps the VALU-bound pass lean (review item 4) and
    # packs sum / sum-of-squares into one (8, Ncols) block.
    row = jax.lax.broadcasted_iota(jnp.int32, (8, tr), 0)
    sel0 = jnp.where(row == 0, 1.0, 0.0).astype(jnp.float32)
    sel1 = jnp.where(row == 1, 1.0, 0.0).astype(jnp.float32)
    stats_ref[...] = (
        jnp.dot(sel0, y, preferred_element_type=jnp.float32)
        + jnp.dot(sel1, y * y, preferred_element_type=jnp.float32)
    )


# ----------------------------------------------------------------------------
# Pass 2: relu(x @ w + bias) * scale + shift  (v_ref rows = bias, scale, shift)
# ----------------------------------------------------------------------------
def _mm_bias_relu_affine_kernel(x_ref, w_ref, v_ref, o_ref):
    y = jnp.dot(x_ref[...], w_ref[...], preferred_element_type=jnp.float32)
    y = jnp.maximum(y + v_ref[0:1, :], 0.0)
    o_ref[...] = y * v_ref[1:2, :] + v_ref[2:3, :]


def conv_transpose_forward(x_nchw, weight, bias, gamma, beta, *,
                           eps=1e-5, out_format="NCHW", force_plain=False):
    """Forward pass of the PyTorch conv_transpose module (training-mode BN).

    x_nchw : (N, Cin, H, W) f32
    weight : (Cin, Cout, 2, 2) f32   (PyTorch ConvTranspose2d layout)
    bias, gamma, beta : (Cout,) f32
    returns (N, Cout, 2H, 2W) f32 (NCHW, PyTorch-matching) or NHWC if requested.
    """
    N, Cin, H, W = x_nchw.shape
    Cout = weight.shape[1]
    assert weight.shape == (Cin, Cout, 2, 2)

    budget, vmem_limit = _vmem_budget_bytes()

    # (Cin, Cout, kh, kw) -> (Cin, kh, kw, Cout)
    wt = jnp.transpose(weight, (0, 2, 3, 1)).astype(jnp.float32)

    x_nhwc = jnp.transpose(x_nchw, (0, 2, 3, 1)).astype(jnp.float32)
    # TODO(synk): fold this NCHW->NHWC input transpose into the x in_spec
    # (NCHW block + in-kernel XLU transpose); secondary: input traffic is only
    # Cin/(4*Cout) of the output traffic.

    fused_w_bytes = (W * Cin) * (4 * W * Cout) * 4
    use_fused = (not force_plain) and (2 * fused_w_bytes <= budget // 2)

    if use_fused:
        # Rows = (n, i); one row of x produces two full NHWC output rows.
        R = N * H
        K = W * Cin
        Ncols = 4 * W * Cout                      # column order: (kh, j, kw, co)
        x2 = x_nhwc.reshape(R, K)                 # col order: (j, ci)
        small = wt.reshape(Cin, 2, 2 * Cout)      # [ci, kh, (kw, co)]
        w_op = jnp.einsum("jJ,ckm->jckJm",
                          jnp.eye(W, dtype=jnp.float32), small).reshape(K, Ncols)
    else:
        # Per-pixel fallback: rows = (n, i, j).
        R = N * H * W
        K = Cin
        Ncols = 4 * Cout                          # column order: (kh, kw, co)
        x2 = x_nhwc.reshape(R, K)
        w_op = wt.reshape(Cin, Ncols)
        # TODO(synk): for large Cin, bf16 inputs (f32 accumulate) would halve
        # LHS HBM traffic here; kept f32 for exactness of this reference impl.

    reps = Ncols // Cout                          # co is the fastest column index
    b_cols = jnp.tile(bias.astype(jnp.float32), reps)          # (Ncols,)

    # ---- tiling -------------------------------------------------------------
    tr = _pick_tr(R, K, Ncols, budget)
    # Guarantee >=4 grid steps when R allows (review item 5: v7x megacore +
    # pipeline overlap); candidates and the cap are both multiples of 8.
    tr = min(tr, max(8, _round_up(-(-R // 4), 8)))
    R_pad = _round_up(max(R, tr), tr)
    G = R_pad // tr
    n_pad_rows = R_pad - R
    if n_pad_rows:
        x2 = jnp.pad(x2, ((0, n_pad_rows), (0, 0)))

    cparams = pltpu.CompilerParams(
        dimension_semantics=("parallel",),
        vmem_limit_bytes=vmem_limit,
    )

    # ---- pass 1: statistics (the (R, Ncols) intermediate never hits HBM) -----
    stats = pl.pallas_call(
        _mm_bias_relu_stats_kernel,
        out_shape=jax.ShapeDtypeStruct((G * 8, Ncols), jnp.float32),
        grid=(G,),
        in_specs=[
            pl.BlockSpec((tr, K), lambda i: (i, 0)),
            pl.BlockSpec((K, Ncols), lambda i: (0, 0)),
            pl.BlockSpec((1, Ncols), lambda i: (0, 0)),
        ],
        out_specs=pl.BlockSpec((8, Ncols), lambda i: (i, 0)),
        compiler_params=cparams,
    )(x2, w_op, b_cols.reshape(1, Ncols))

    stats = stats.reshape(G, 8, Ncols)
    col_sum = jnp.sum(stats[:, 0, :], axis=0)
    col_ssq = jnp.sum(stats[:, 1, :], axis=0)
    # Zero-padded rows contribute exactly relu(bias) per column; subtract that
    # here instead of masking inside the hot loop (review item 3).
    if n_pad_rows:
        pad_y = jnp.maximum(b_cols, 0.0)
        col_sum = col_sum - jnp.float32(n_pad_rows) * pad_y
        col_ssq = col_ssq - jnp.float32(n_pad_rows) * pad_y * pad_y

    ch_sum = jnp.sum(col_sum.reshape(reps, Cout), axis=0)
    ch_ssq = jnp.sum(col_ssq.reshape(reps, Cout), axis=0)
    count = jnp.float32(R * reps)                 # = N * 2H * 2W
    mean = ch_sum / count
    # TODO(synk): E[y^2]-E[y]^2 can cancel in f32 when mean^2 >> var; a
    # shifted / Chan-style combine of per-block moments would be more robust.
    var = jnp.maximum(ch_ssq / count - mean * mean, 0.0)   # biased (training) var
    inv_std = jax.lax.rsqrt(var + eps)
    scale_ch = gamma.astype(jnp.float32) * inv_std
    shift_ch = beta.astype(jnp.float32) - mean * scale_ch
    vecs = jnp.stack(
        [b_cols, jnp.tile(scale_ch, reps), jnp.tile(shift_ch, reps)], axis=0)

    # ---- pass 2: recompute matmul, fused bias + ReLU + BN, lane-dense write --
    out2 = pl.pallas_call(
        _mm_bias_relu_affine_kernel,
        out_shape=jax.ShapeDtypeStruct((R_pad, Ncols), jnp.float32),
        grid=(G,),
        in_specs=[
            pl.BlockSpec((tr, K), lambda i: (i, 0)),
            pl.BlockSpec((K, Ncols), lambda i: (0, 0)),
            pl.BlockSpec((3, Ncols), lambda i: (0, 0)),
        ],
        out_specs=pl.BlockSpec((tr, Ncols), lambda i: (i, 0)),
        compiler_params=cparams,
    )(x2, w_op, vecs)

    # ---- epilogue -------------------------------------------------------------
    if use_fused:
        # out2 rows are already NHWC-flat: row (n,i) holds output rows 2i,2i+1.
        y_nhwc = out2[:R].reshape(N, 2 * H, 2 * W, Cout)   # pure reshape, no copy
        if out_format == "NHWC":
            return y_nhwc
        return jnp.transpose(y_nhwc, (0, 3, 1, 2))
    y6 = out2[:R].reshape(N, H, W, 2, 2, Cout)             # fallback rearrange
    if out_format == "NHWC":
        return jnp.transpose(y6, (0, 1, 3, 2, 4, 5)).reshape(N, 2 * H, 2 * W, Cout)
    return jnp.transpose(y6, (0, 5, 1, 3, 2, 4)).reshape(N, Cout, 2 * H, 2 * W)


# ----------------------------------------------------------------------------
# Pure-JAX reference (same math) for a sanity check
# ----------------------------------------------------------------------------
def _reference(x, weight, bias, gamma, beta, eps=1e-5):
    N, Cin, H, W = x.shape
    Cout = weight.shape[1]
    y = jnp.einsum("ncij,cokl->noikjl", x, weight).reshape(N, Cout, 2 * H, 2 * W)
    y = y + bias[None, :, None, None]
    y = jnp.maximum(y, 0.0)
    mean = jnp.mean(y, axis=(0, 2, 3), keepdims=True)
    var = jnp.mean((y - mean) ** 2, axis=(0, 2, 3), keepdims=True)
    yhat = (y - mean) * jax.lax.rsqrt(var + eps)
    return yhat * gamma[None, :, None, None] + beta[None, :, None, None]


if __name__ == "__main__":
    key = jax.random.PRNGKey(0)

    N, Cin, Cout, H, W = 2, 4, 8, 16, 16
    kx, kw_, kb = jax.random.split(key, 3)
    x = jax.random.normal(kx, (N, Cin, H, W), dtype=jnp.float32)
    weight = 0.1 * jax.random.normal(kw_, (Cin, Cout, 2, 2), dtype=jnp.float32)
    bias = 0.05 * jax.random.normal(kb, (Cout,), dtype=jnp.float32)
    gamma = jnp.ones((Cout,), dtype=jnp.float32)   # BatchNorm2d default weight
    beta = jnp.zeros((Cout,), dtype=jnp.float32)   # BatchNorm2d default bias

    fwd = jax.jit(conv_transpose_forward, static_argnames=("out_format", "force_plain"))

    # Primary check: fused path, NCHW output (PyTorch-matching).
    out = jax.block_until_ready(fwd(x, weight, bias, gamma, beta))
    ref = _reference(x, weight, bias, gamma, beta)
    assert out.shape == (N, Cout, 2 * H, 2 * W)
    assert jnp.max(jnp.abs(out - ref)) < 1e-4

    # NHWC output path: kernel layout returned directly, zero epilogue transposes.
    out_nhwc = jax.block_until_ready(fwd(x, weight, bias, gamma, beta, out_format="NHWC"))
    assert jnp.max(jnp.abs(out_nhwc - jnp.transpose(ref, (0, 2, 3, 1)))) < 1e-4

    # Odd spatial size: exercises row padding + host-side stats correction.
    H2, W2 = 5, 5
    x_odd = jax.random.normal(jax.random.PRNGKey(1), (N, Cin, H2, W2), dtype=jnp.float32)
    out2 = jax.block_until_ready(fwd(x_odd, weight, bias, gamma, beta))
    ref2 = _reference(x_odd, weight, bias, gamma, beta)
    assert out2.shape == (N, Cout, 2 * H2, 2 * W2)
    assert jnp.max(jnp.abs(out2 - ref2)) < 1e-4

    # Large-channel fallback path (per-pixel matmul layout), forced at a small
    # shape so it stays compile-covered.
    out3 = jax.block_until_ready(fwd(x, weight, bias, gamma, beta, force_plain=True))
    assert jnp.max(jnp.abs(out3 - ref)) < 1e-4

    print("KERNEL_OK")
</pallas_src>

<mosaic_0001>
module attributes {stable_mosaic.version = 11 : i64} {
  func.func @_mm_bias_relu_stats_kernel(%arg0: i32, %arg1: memref<8x64xf32, #tpu.memory_space<vmem>>, %arg2: memref<64x512xf32, #tpu.memory_space<vmem>>, %arg3: memref<1x512xf32, #tpu.memory_space<vmem>>, %arg4: memref<8x512xf32, #tpu.memory_space<vmem>>) attributes {dimension_semantics = [#tpu.dimension_semantics<parallel>], iteration_bounds = array<i64: 4>, scalar_prefetch = 0 : i64, scratch_operands = 0 : i64, tpu.core_type = #tpu.core_type<tc>, window_params = [{transform_indices = @transform_0, window_bounds = array<i64: 8, 64>}, {pipeline_mode = #tpu.pipeline_mode<synchronous>, transform_indices = @transform_1, window_bounds = array<i64: 64, 512>}, {pipeline_mode = #tpu.pipeline_mode<synchronous>, transform_indices = @transform_2, window_bounds = array<i64: 1, 512>}, {transform_indices = @transform_3, window_bounds = array<i64: 8, 512>}]} {
    %c0 = arith.constant 0 : index
    %c0_0 = arith.constant 0 : index
    %0 = vector.load %arg1[%c0, %c0_0] : memref<8x64xf32, #tpu.memory_space<vmem>>, vector<8x64xf32>
    %c0_1 = arith.constant 0 : index
    %c0_2 = arith.constant 0 : index
    %1 = vector.load %arg2[%c0_1, %c0_2] : memref<64x512xf32, #tpu.memory_space<vmem>>, vector<64x512xf32>
    %cst = arith.constant dense<0.000000e+00> : vector<8x512xf32>
    %2 = tpu.matmul %0, %1, %cst {dimension_numbers = #tpu.dot_dimension_numbers<[1], [0], [0], [1], [0, 0, 1, 1], [], []>} : vector<8x64xf32>, vector<64x512xf32>, vector<8x512xf32> -> vector<8x512xf32>
    %c0_3 = arith.constant 0 : index
    %c0_4 = arith.constant 0 : index
    %3 = vector.load %arg3[%c0_3, %c0_4] : memref<1x512xf32, #tpu.memory_space<vmem>>, vector<1x512xf32>
    %4 = vector.broadcast %3 : vector<1x512xf32> to vector<8x512xf32>
    %5 = arith.addf %2, %4 : vector<8x512xf32>
    %cst_5 = arith.constant 0.000000e+00 : f32
    %6 = vector.broadcast %cst_5 : f32 to vector<8x512xf32>
    %7 = arith.maximumf %5, %6 : vector<8x512xf32>
    %8 = tpu.iota {dimensions = array<i32: 0>} : vector<8x8xi32>
    %c0_i32 = arith.constant 0 : i32
    %9 = vector.broadcast %c0_i32 : i32 to vector<8x8xi32>
    %10 = arith.cmpi eq, %8, %9 : vector<8x8xi32>
    %cst_6 = arith.constant 1.000000e+00 : f32
    %cst_7 = arith.constant 0.000000e+00 : f32
    %11 = vector.broadcast %cst_6 : f32 to vector<8x8xf32>
    %12 = vector.broadcast %cst_7 : f32 to vector<8x8xf32>
    %13 = arith.select %10, %11, %12 : vector<8x8xi1>, vector<8x8xf32>
    %c1_i32 = arith.constant 1 : i32
    %14 = vector.broadcast %c1_i32 : i32 to vector<8x8xi32>
    %15 = arith.cmpi eq, %8, %14 : vector<8x8xi32>
    %cst_8 = arith.constant 1.000000e+00 : f32
    %cst_9 = arith.constant 0.000000e+00 : f32
    %16 = vector.broadcast %cst_8 : f32 to vector<8x8xf32>
    %17 = vector.broadcast %cst_9 : f32 to vector<8x8xf32>
    %18 = arith.select %15, %16, %17 : vector<8x8xi1>, vector<8x8xf32>
    %cst_10 = arith.constant dense<0.000000e+00> : vector<8x512xf32>
    %19 = tpu.matmul %13, %7, %cst_10 {dimension_numbers = #tpu.dot_dimension_numbers<[1], [0], [0], [1], [0, 0, 1, 1], [], []>} : vector<8x8xf32>, vector<8x512xf32>, vector<8x512xf32> -> vector<8x512xf32>
    %20 = arith.mulf %7, %7 : vector<8x512xf32>
    %cst_11 = arith.constant dense<0.000000e+00> : vector<8x512xf32>
    %21 = tpu.matmul %18, %20, %cst_11 {dimension_numbers = #tpu.dot_dimension_numbers<[1], [0], [0], [1], [0, 0, 1, 1], [], []>} : vector<8x8xf32>, vector<8x512xf32>, vector<8x512xf32> -> vector<8x512xf32>
    %22 = arith.addf %19, %21 : vector<8x512xf32>
    %c0_12 = arith.constant 0 : index
    %c0_13 = arith.constant 0 : index
    %23 = vector.load %arg4[%c0_12, %c0_13] : memref<8x512xf32, #tpu.memory_space<vmem>>, vector<8x512xf32>
    tpu.vector_store %arg4[%c0_12, %c0_13], %22 {strides = array<i32>} : memref<8x512xf32, #tpu.memory_space<vmem>>, vector<8x512xf32>,
    return
  }
  func.func @transform_0(%arg0: i32) -> (i32, i32) {
    %c0_i32 = arith.constant 0 : i32
    %c0_i32_0 = arith.constant 0 : i32
    return %arg0, %c0_i32 : i32, i32
  }
  func.func @transform_1(%arg0: i32) -> (i32, i32) {
    %c0_i32 = arith.constant 0 : i32
    %c0_i32_0 = arith.constant 0 : i32
    %c0_i32_1 = arith.constant 0 : i32
    return %c0_i32, %c0_i32_0 : i32, i32
  }
  func.func @transform_2(%arg0: i32) -> (i32, i32) {
    %c0_i32 = arith.constant 0 : i32
    %c0_i32_0 = arith.constant 0 : i32
    %c0_i32_1 = arith.constant 0 : i32
    return %c0_i32, %c0_i32_0 : i32, i32
  }
  func.func @transform_3(%arg0: i32) -> (i32, i32) {
    %c0_i32 = arith.constant 0 : i32
    %c0_i32_0 = arith.constant 0 : i32
    return %arg0, %c0_i32 : i32, i32
  }
}

module attributes {stable_mosaic.version = 11 : i64} {
  func.func @_mm_bias_relu_affine_kernel(%arg0: i32, %arg1: memref<8x64xf32, #tpu.memory_space<vmem>>, %arg2: memref<64x512xf32, #tpu.memory_space<vmem>>, %arg3: memref<3x512xf32, #tpu.memory_space<vmem>>, %arg4: memref<8x512xf32, #tpu.memory_space<vmem>>) attributes {dimension_semantics = [#tpu.dimension_semantics<parallel>], iteration_bounds = array<i64: 4>, scalar_prefetch = 0 : i64, scratch_operands = 0 : i64, tpu.core_type = #tpu.core_type<tc>, window_params = [{transform_indices = @transform_0, window_bounds = array<i64: 8, 64>}, {pipeline_mode = #tpu.pipeline_mode<synchronous>, transform_indices = @transform_1, window_bounds = array<i64: 64, 512>}, {pipeline_mode = #tpu.pipeline_mode<synchronous>, transform_indices = @transform_2, window_bounds = array<i64: 3, 512>}, {transform_indices = @transform_3, window_bounds = array<i64: 8, 512>}]} {
    %c0 = arith.constant 0 : index
    %c0_0 = arith.constant 0 : index
    %0 = vector.load %arg1[%c0, %c0_0] : memref<8x64xf32, #tpu.memory_space<vmem>>, vector<8x64xf32>
    %c0_1 = arith.constant 0 : index
    %c0_2 = arith.constant 0 : index
    %1 = vector.load %arg2[%c0_1, %c0_2] : memref<64x512xf32, #tpu.memory_space<vmem>>, vector<64x512xf32>
    %cst = arith.constant dense<0.000000e+00> : vector<8x512xf32>
    %2 = tpu.matmul %0, %1, %cst {dimension_numbers = #tpu.dot_dimension_numbers<[1], [0], [0], [1], [0, 0, 1, 1], [], []>} : vector<8x64xf32>, vector<64x512xf32>, vector<8x512xf32> -> vector<8x512xf32>
    %c0_3 = arith.constant 0 : index
    %c0_4 = arith.constant 0 : index
    %3 = vector.load %arg3[%c0_3, %c0_4] : memref<3x512xf32, #tpu.memory_space<vmem>>, vector<1x512xf32>
    %4 = vector.broadcast %3 : vector<1x512xf32> to vector<8x512xf32>
    %5 = arith.addf %2, %4 : vector<8x512xf32>
    %cst_5 = arith.constant 0.000000e+00 : f32
    %6 = vector.broadcast %cst_5 : f32 to vector<8x512xf32>
    %7 = arith.maximumf %5, %6 : vector<8x512xf32>
    %c1 = arith.constant 1 : index
    %c0_6 = arith.constant 0 : index
    %8 = vector.load %arg3[%c1, %c0_6] : memref<3x512xf32, #tpu.memory_space<vmem>>, vector<1x512xf32>
    %9 = vector.broadcast %8 : vector<1x512xf32> to vector<8x512xf32>
    %10 = arith.mulf %7, %9 : vector<8x512xf32>
    %c2 = arith.constant 2 : index
    %c0_7 = arith.constant 0 : index
    %11 = vector.load %arg3[%c2, %c0_7] : memref<3x512xf32, #tpu.memory_space<vmem>>, vector<1x512xf32>
    %12 = vector.broadcast %11 : vector<1x512xf32> to vector<8x512xf32>
    %13 = arith.addf %10, %12 : vector<8x512xf32>
    %c0_8 = arith.constant 0 : index
    %c0_9 = arith.constant 0 : index
    %14 = vector.load %arg4[%c0_8, %c0_9] : memref<8x512xf32, #tpu.memory_space<vmem>>, vector<8x512xf32>
    tpu.vector_store %arg4[%c0_8, %c0_9], %13 {strides = array<i32>} : memref<8x512xf32, #tpu.memory_space<vmem>>, vector<8x512xf32>,
    return
  }
  func.func @transform_0(%arg0: i32) -> (i32, i32) {
    %c0_i32 = arith.constant 0 : i32
    %c0_i32_0 = arith.constant 0 : i32
    return %arg0, %c0_i32 : i32, i32
  }
  func.func @transform_1(%arg0: i32) -> (i32, i32) {
    %c0_i32 = arith.constant 0 : i32
    %c0_i32_0 = arith.constant 0 : i32
    %c0_i32_1 = arith.constant 0 : i32
    return %c0_i32, %c0_i32_0 : i32, i32
  }
  func.func @transform_2(%arg0: i32) -> (i32, i32) {
    %c0_i32 = arith.constant 0 : i32
    %c0_i32_0 = arith.constant 0 : i32
    %c0_i32_1 = arith.constant 0 : i32
    return %c0_i32, %c0_i32_0 : i32, i32
  }
  func.func @transform_3(%arg0: i32) -> (i32, i32) {
    %c0_i32 = arith.constant 0 : i32
    %c0_i32_0 = arith.constant 0 : i32
    return %arg0, %c0_i32 : i32, i32
  }
}

</mosaic_0001>

<llo_original>
// kernel: tile.29
$region0: #{tile.29}
  %s0 = inlined_call_operand.vmem [shape: f32[64,8], index: 0, kind: input, shape index: {}]
  %s1 = inlined_call_operand.vmem [shape: f32[1,512], index: 1, kind: output, shape index: {}]
  $region1: #{tile.29} parent=0
    #allocation0 [shape = 'u8[16384]{0}', space=vmem, size = 0x4000, scoped, tag = 'scoped mem for output reshape']
    %s2 = smov 3
    %v3 = vld [vmem:[%s0] ss:$16 sm:%s2]
    %s4 = smov 12
    %v5 = vld [vmem:[%s0] ss:$16 sm:%s4]
    %vm6 = vcmask 1043458
    %v7 = vsel %vm6, %v5, %v3
    %vm8 = vcmask 64512
    %9 = vst.msk [vmem:[#allocation0] ss:$8 sm:$0xf] %vm8, %v7
    %s10 = scalar_lea.vmem %s0, 15
    %s11 = smov 3
    %v12 = vld [vmem:[%s10] ss:$16 sm:%s11]
    %s13 = scalar_lea.vmem %s0, 15
    %s14 = smov 12
    %v15 = vld [vmem:[%s13] ss:$16 sm:%s14]
    %vm16 = vcmask 1043458
    %v17 = vsel %vm16, %v15, %v12
    %18 = vrot.lane.b32.xlu0 %v17, 120
    %v19 = vpop.permute.xlu0 %18
    %vm20 = vcmask 1048512
    %21 = vst.msk [vmem:[#allocation0] ss:$8 sm:$0xf] %vm20, %v19
    %s22 = scalar_lea.vmem %s0, 14
    %s23 = smov 3
    %v24 = vld [vmem:[%s22] ss:$16 sm:%s23]
    %s25 = scalar_lea.vmem %s0, 14
    %s26 = smov 12
    %v27 = vld [vmem:[%s25] ss:$16 sm:%s26]
    %vm28 = vcmask 1043458
    %v29 = vsel %vm28, %v27, %v24
    %30 = vrot.lane.b32.xlu0 %v29, 112
    %v31 = vpop.permute.xlu0 %30
    %vm32 = vcmask 982912
    %33 = vst.msk [vmem:[#allocation0] ss:$8 sm:$0xf] %vm32, %v31
    %s34 = scalar_lea.vmem %s0, 13
    %s35 = smov 3
    %v36 = vld [vmem:[%s34] ss:$16 sm:%s35]
    %s37 = scalar_lea.vmem %s0, 13
    %s38 = smov 12
    %v39 = vld [vmem:[%s37] ss:$16 sm:%s38]
    %vm40 = vcmask 1043458
    %v41 = vsel %vm40, %v39, %v36
    %42 = vrot.lane.b32.xlu0 %v41, 104
    %v43 = vpop.permute.xlu0 %42
    %vm44 = vcmask 917312
    %45 = vst.msk [vmem:[#allocation0] ss:$8 sm:$0xf] %vm44, %v43
    %s46 = scalar_lea.vmem %s0, 12
    %s47 = smov 3
    %v48 = vld [vmem:[%s46] ss:$16 sm:%s47]
    %s49 = scalar_lea.vmem %s0, 12
    %s50 = smov 12
    %v51 = vld [vmem:[%s49] ss:$16 sm:%s50]
    %vm52 = vcmask 1043458
    %v53 = vsel %vm52, %v51, %v48
    %54 = vrot.lane.b32.xlu0 %v53, 96
    %v55 = vpop.permute.xlu0 %54
    %vm56 = vcmask 851712
    %57 = vst.msk [vmem:[#allocation0] ss:$8 sm:$0xf] %vm56, %v55
    %s58 = scalar_lea.vmem %s0, 11
    %s59 = smov 3
    %v60 = vld [vmem:[%s58] ss:$16 sm:%s59]
    %s61 = scalar_lea.vmem %s0, 11
    %s62 = smov 12
    %v63 = vld [vmem:[%s61] ss:$16 sm:%s62]
    %vm64 = vcmask 1043458
    %v65 = vsel %vm64, %v63, %v60
    %66 = vrot.lane.b32.xlu0 %v65, 88
    %v67 = vpop.permute.xlu0 %66
    %vm68 = vcmask 786112
    %69 = vst.msk [vmem:[#allocation0] ss:$8 sm:$0xf] %vm68, %v67
    %s70 = scalar_lea.vmem %s0, 10
    %s71 = smov 3
    %v72 = vld [vmem:[%s70] ss:$16 sm:%s71]
    %s73 = scalar_lea.vmem %s0, 10
    %s74 = smov 12
    %v75 = vld [vmem:[%s73] ss:$16 sm:%s74]
    %vm76 = vcmask 1043458
    %v77 = vsel %vm76, %v75, %v72
    %78 = vrot.lane.b32.xlu0 %v77, 80
    %v79 = vpop.permute.xlu0 %78
    %vm80 = vcmask 720512
    %81 = vst.msk [vmem:[#allocation0] ss:$8 sm:$0xf] %vm80, %v79
    %s82 = scalar_lea.vmem %s0, 9
    %s83 = smov 3
    %v84 = vld [vmem:[%s82] ss:$16 sm:%s83]
    %s85 = scalar_lea.vmem %s0, 9
    %s86 = smov 12
    %v87 = vld [vmem:[%s85] ss:$16 sm:%s86]
    %vm88 = vcmask 1043458
    %v89 = vsel %vm88, %v87, %v84
    %90 = vrot.lane.b32.xlu0 %v89, 72
    %v91 = vpop.permute.xlu0 %90
    %vm92 = vcmask 654912
    %93 = vst.msk [vmem:[#allocation0] ss:$8 sm:$0xf] %vm92, %v91
    %s94 = scalar_lea.vmem %s0, 8
    %s95 = smov 3
    %v96 = vld [vmem:[%s94] ss:$16 sm:%s95]
    %s97 = scalar_lea.vmem %s0, 8
    %s98 = smov 12
    %v99 = vld [vmem:[%s97] ss:$16 sm:%s98]
    %vm100 = vcmask 1043458
    %v101 = vsel %vm100, %v99, %v96
    %102 = vrot.lane.b32.xlu0 %v101, 64
    %v103 = vpop.permute.xlu0 %102
    %vm104 = vcmask 589312
    %105 = vst.msk [vmem:[#allocation0] ss:$8 sm:$0xf] %vm104, %v103
    %s106 = scalar_lea.vmem %s0, 7
    %s107 = smov 3
    %v108 = vld [vmem:[%s106] ss:$16 sm:%s107]
    %s109 = scalar_lea.vmem %s0, 7
    %s110 = smov 12
    %v111 = vld [vmem:[%s109] ss:$16 sm:%s110]
    %vm112 = vcmask 1043458
    %v113 = vsel %vm112, %v111, %v108
    %114 = vrot.lane.b32.xlu0 %v113, 56
    %v115 = vpop.permute.xlu0 %114
    %vm116 = vcmask 523712
    %117 = vst.msk [vmem:[#allocation0] ss:$8 sm:$0xf] %vm116, %v115
    %s118 = scalar_lea.vmem %s0, 6
    %s119 = smov 3
    %v120 = vld [vmem:[%s118] ss:$16 sm:%s119]
    %s121 = scalar_lea.vmem %s0, 6
    %s122 = smov 12
    %v123 = vld [vmem:[%s121] ss:$16 sm:%s122]
    %vm124 = vcmask 1043458
    %v125 = vsel %vm124, %v123, %v120
    %126 = vrot.lane.b32.xlu0 %v125, 48
    %v127 = vpop.permute.xlu0 %126
    %vm128 = vcmask 458112
    %129 = vst.msk [vmem:[#allocation0] ss:$8 sm:$0xf] %vm128, %v127
    %s130 = scalar_lea.vmem %s0, 5
    %s131 = smov 3
    %v132 = vld [vmem:[%s130] ss:$16 sm:%s131]
    %s133 = scalar_lea.vmem %s0, 5
    %s134 = smov 12
    %v135 = vld [vmem:[%s133] ss:$16 sm:%s134]
    %vm136 = vcmask 1043458
    %v137 = vsel %vm136, %v135, %v132
    %138 = vrot.lane.b32.xlu0 %v137, 40
    %v139 = vpop.permute.xlu0 %138
    %vm140 = vcmask 392512
    %141 = vst.msk [vmem:[#allocation0] ss:$8 sm:$0xf] %vm140, %v139
    %s142 = scalar_lea.vmem %s0, 4
    %s143 = smov 3
    %v144 = vld [vmem:[%s142] ss:$16 sm:%s143]
    %s145 = scalar_lea.vmem %s0, 4
    %s146 = smov 12
    %v147 = vld [vmem:[%s145] ss:$16 sm:%s146]
    %vm148 = vcmask 1043458
    %v149 = vsel %vm148, %v147, %v144
    %150 = vrot.lane.b32.xlu0 %v149, 32
    %v151 = vpop.permute.xlu0 %150
    %vm152 = vcmask 326912
    %153 = vst.msk [vmem:[#allocation0] ss:$8 sm:$0xf] %vm152, %v151
    %s154 = scalar_lea.vmem %s0, 3
    %s155 = smov 3
    %v156 = vld [vmem:[%s154] ss:$16 sm:%s155]
    %s157 = scalar_lea.vmem %s0, 3
    %s158 = smov 12
    %v159 = vld [vmem:[%s157] ss:$16 sm:%s158]
    %vm160 = vcmask 1043458
    %v161 = vsel %vm160, %v159, %v156
    %162 = vrot.lane.b32.xlu0 %v161, 24
    %v163 = vpop.permute.xlu0 %162
    %vm164 = vcmask 261312
    %165 = vst.msk [vmem:[#allocation0] ss:$8 sm:$0xf] %vm164, %v163
    %s166 = scalar_lea.vmem %s0, 2
    %s167 = smov 3
    %v168 = vld [vmem:[%s166] ss:$16 sm:%s167]
    %s169 = scalar_lea.vmem %s0, 2
    %s170 = smov 12
    %v171 = vld [vmem:[%s169] ss:$16 sm:%s170]
    %vm172 = vcmask 1043458
    %v173 = vsel %vm172, %v171, %v168
    %174 = vrot.lane.b32.xlu0 %v173, 16
    %v175 = vpop.permute.xlu0 %174
    %vm176 = vcmask 195712
    %177 = vst.msk [vmem:[#allocation0] ss:$8 sm:$0xf] %vm176, %v175
    %s178 = scalar_lea.vmem %s0, 1
    %s179 = smov 3
    %v180 = vld [vmem:[%s178] ss:$16 sm:%s179]
    %s181 = scalar_lea.vmem %s0, 1
    %s182 = smov 12
    %v183 = vld [vmem:[%s181] ss:$16 sm:%s182]
    %vm184 = vcmask 1043458
    %v185 = vsel %vm184, %v183, %v180
    %186 = vrot.lane.b32.xlu0 %v185, 8
    %v187 = vpop.permute.xlu0 %186
    %vm188 = vcmask 130112
    %189 = vst.msk [vmem:[#allocation0] ss:$8 sm:$0xf] %vm188, %v187
    %s191 = sshllo.u32 0, 1
    %v193 = vld [vmem:[#allocation0] sm:%s191]
    %s194 = sshllo.u32 0, 1
    %195 = vst [vmem:[%s1] sm:%s194] %v193
    %s196 = scalar_lea.vmem [#allocation0], 8
    %v197 = vld [vmem:[%s196] sm:%s191]
    %s198 = sshllo.u32 0, 1
    %s199 = scalar_lea.vmem %s1, 1
    %200 = vst [vmem:[%s199] sm:%s198] %v197
    %s201 = scalar_lea.vmem [#allocation0], 16
    %v202 = vld [vmem:[%s201] sm:%s191]
    %s203 = sshllo.u32 0, 1
    %s204 = smul.addr 1, 2
    %s205 = scalar_lea.vmem %s1, %s204
    %206 = vst [vmem:[%s205] sm:%s203] %v202
    %s207 = scalar_lea.vmem [#allocation0], 24
    %v208 = vld [vmem:[%s207] sm:%s191]
    %s209 = sshllo.u32 0, 1
    %s210 = smul.addr 1, 3
    %s211 = scalar_lea.vmem %s1, %s210
    %212 = vst [vmem:[%s211] sm:%s209] %v208

// kernel: tile.19
$region0: #{tile.19}
  #allocation0 [shape = 's32[1]{0}', space=sflag, size = 0x4, scoped, tag = 'scoped memory for tile.19']
  %s0 = inlined_call_operand.vmem [shape: f32[8], index: 0, kind: input, shape index: {}]
  %s1 = inlined_call_operand.vmem [shape: f32[64,8], index: 1, kind: output, shape index: {}]
  // Predicated region
  $region2: #{tile.19} parent=0 // pred_check
    _
  $region3: #{tile.19} parent=0 // pred_check_branch
    %3 = sbr.rel (0) target = $region5
  $region4: #{tile.19} parent=0 // pred_region
    _
  $region5: #{tile.19} parent=0 // pred_fallthru
    _
  %v4 = vld [vmem:[%s0] ss:$0 sm:$0xff]
  %5 = vst [vmem:[%s1] sm:$0xff] %v4
  %s6 = scalar_lea.vmem %s1, 8
  %7 = vst [vmem:[%s6] sm:$0xff] %v4
  %s8 = scalar_lea.vmem %s1, 16
  %9 = vst [vmem:[%s8] sm:$0xff] %v4
  %s10 = scalar_lea.vmem %s1, 24
  %11 = vst [vmem:[%s10] sm:$0xff] %v4
  %s12 = scalar_lea.vmem %s1, 32
  %13 = vst [vmem:[%s12] sm:$0xff] %v4
  %s14 = scalar_lea.vmem %s1, 40
  %15 = vst [vmem:[%s14] sm:$0xff] %v4
  %s16 = scalar_lea.vmem %s1, 48
  %17 = vst [vmem:[%s16] sm:$0xff] %v4
  %s18 = scalar_lea.vmem %s1, 56
  %19 = vst [vmem:[%s18] sm:$0xff] %v4

// kernel: conv_transpose_forward.2
$region0: #{conv_transpose_forward.2}
  #allocation0 [shape = 'u32[]', space=smem, size = 0x4, offset = 0x4, fixed_abs, tag = 'smem constant byte address 0x4 - core index']
  #allocation1 [shape = 'u32[144,128]{1,0:T(1,128)}', space=vmem, size = 0x12000, scoped, tag = 'internal scratch']
  %s0 = inlined_call_operand.vmem [shape: f32[32,64], index: 0, kind: input, shape index: {}]
  %s1 = inlined_call_operand.vmem [shape: f32[64,512], index: 1, kind: input, shape index: {}]
  %s2 = inlined_call_operand.vmem [shape: f32[1,512], index: 2, kind: input, shape index: {}]
  %s3 = inlined_call_operand.vmem [shape: f32[32,512], index: 3, kind: output, shape index: {}]
  %s4 = sld [smem:[#allocation0]]
  $region45: #{conv_transpose_forward.2} parent=0
    _
  %s6 = ssub.s32 1, %s4
  %s7 = scalar_select 0, %s6, %s4
  loop: start=0, step=1, limit=6
  $region2: #{conv_transpose_forward.2} parent=0 // loop_pre_header
    _
  $region3: #{conv_transpose_forward.2} parent=0 // loop_header
    %s9 = sphi 0, %s13
    %p10 = scmp.ge.s32.totalorder %s9, 6
    %s19 = sphi 0, %s21
    %s22 = sphi 0, %s19
    %s23 = sphi 0, %s22
    %s39 = sphi 0, %s23
    %s43 = sphi 0, %s43
    %s45 = sphi 0, %s43
    %s46 = sphi 0, %s45
    %s60 = sphi 0, %s46
    %s64 = sphi 0, %s64
    %s66 = sphi 0, %s64
    %s67 = sphi 0, %s66
    %s81 = sphi 0, %s67
    %s87 = sphi 0, %s89
    %s90 = sphi 0, %s87
    %s91 = sphi 0, %s90
    %s107 = sphi 0, %s91
  $region4: #{conv_transpose_forward.2} parent=0 // loop_header_branch
    %12 = sbr.rel (%p10) target = $region8
  $region5: #{conv_transpose_forward.2} parent=0 // loop_body
    %s14 = ssub.s32 %s9, 1
    %s15 = ssub.s32 %s9, 2
    %s16 = sadd.s32 %s9, 1
    %s17 = ssub.s32 %s9, %s16
    %p18 = scmp.eq.s32.totalorder %s17, 0
    %s20 = sadd.s32 %s19, 1
    %s21 = scalar_select %p18, %s19, %s20
    %p24 = pneg %p18
    %p25 = scmp.eq.s32.totalorder %s9, 3
    %p26 = por %p24, %p25
    %p27 = scmp.ne.s32.totalorder %s19, %s22
    %p28 = scmp.eq.s32.totalorder %s9, 0
    %p29 = por %p27, %p28
    %p30 = scmp.ne.s32.totalorder %s19, %s22
    %p31 = scmp.eq.s32.totalorder %s14, 3
    %p32 = por %p30, %p31
    %p33 = scmp.ne.s32.totalorder %s22, %s23
    %p34 = scmp.eq.s32.totalorder %s14, 0
    %p35 = por %p33, %p34
    %p36 = scmp.ne.s32.totalorder %s22, %s23
    %p37 = scmp.eq.s32.totalorder %s15, 3
    %p38 = por %p36, %p37
    %p40 = scmp.ne.s32.totalorder %s23, %s39
    %p41 = scmp.eq.s32.totalorder %s15, 0
    %p42 = por %p40, %p41
    %s44 = sadd.s32 %s43, 1
    %p47 = scmp.eq.s32.totalorder %s9, 3
    %p48 = scmp.ne.s32.totalorder %s43, %s45
    %p49 = scmp.eq.s32.totalorder %s9, 0
    %p50 = por %p48, %p49
    %p51 = scmp.ne.s32.totalorder %s43, %s45
    %p52 = scmp.eq.s32.totalorder %s14, 3
    %p53 = por %p51, %p52
    %p54 = scmp.ne.s32.totalorder %s45, %s46
    %p55 = scmp.eq.s32.totalorder %s14, 0
    %p56 = por %p54, %p55
    %p57 = scmp.ne.s32.totalorder %s45, %s46
    %p58 = scmp.eq.s32.totalorder %s15, 3
    %p59 = por %p57, %p58
    %p61 = scmp.ne.s32.totalorder %s46, %s60
    %p62 = scmp.eq.s32.totalorder %s15, 0
    %p63 = por %p61, %p62
    %s65 = sadd.s32 %s64, 1
    %p68 = scmp.eq.s32.totalorder %s9, 3
    %p69 = scmp.ne.s32.totalorder %s64, %s66
    %p70 = scmp.eq.s32.totalorder %s9, 0
    %p71 = por %p69, %p70
    %p72 = scmp.ne.s32.totalorder %s64, %s66
    %p73 = scmp.eq.s32.totalorder %s14, 3
    %p74 = por %p72, %p73
    %p75 = scmp.ne.s32.totalorder %s66, %s67
    %p76 = scmp.eq.s32.totalorder %s14, 0
    %p77 = por %p75, %p76
    %p78 = scmp.ne.s32.totalorder %s66, %s67
    %p79 = scmp.eq.s32.totalorder %s15, 3
    %p80 = por %p78, %p79
    %p82 = scmp.ne.s32.totalorder %s67, %s81
    %p83 = scmp.eq.s32.totalorder %s15, 0
    %p84 = por %p82, %p83
    %s85 = ssub.s32 %s9, %s16
    %p86 = scmp.eq.s32.totalorder %s85, 0
    %s88 = sadd.s32 %s87, 1
    %s89 = scalar_select %p86, %s87, %s88
    %p92 = pneg %p86
    %p93 = scmp.eq.s32.totalorder %s9, 3
    %p94 = por %p92, %p93
    %p95 = scmp.ne.s32.totalorder %s87, %s90
    %p96 = scmp.eq.s32.totalorder %s9, 0
    %p97 = por %p95, %p96
    %p98 = scmp.ne.s32.totalorder %s87, %s90
    %p99 = scmp.eq.s32.totalorder %s14, 3
    %p100 = por %p98, %p99
    %p101 = scmp.ne.s32.totalorder %s90, %s91
    %p102 = scmp.eq.s32.totalorder %s14, 0
    %p103 = por %p101, %p102
    %p104 = scmp.ne.s32.totalorder %s90, %s91
    %p105 = scmp.eq.s32.totalorder %s15, 3
    %p106 = por %p104, %p105
    %p108 = scmp.ne.s32.totalorder %s91, %s107
    %p109 = scmp.eq.s32.totalorder %s15, 0
    %p110 = por %p108, %p109
    %p111 = scmp.le.s32.totalorder 1, %s9
    %p112 = scmp.lt.s32.totalorder %s9, 5
    %p113 = pnand %p111, %p112
    %p114 = pneg %p113
    // Predicated region
    $region9: #{conv_transpose_forward.2} parent=5 // pred_check
      _
    $region10: #{conv_transpose_forward.2} parent=5 // pred_check_branch
      %116 = sbr.rel (%p113) target = $region12
    $region11: #{conv_transpose_forward.2} parent=5 // pred_region
      %s117 = ssub.s32 %s9, 1
      // Predicated region
      $region13: #{conv_transpose_forward.2} parent=11 // pred_check
        %p118 = pneg %p56
      $region14: #{conv_transpose_forward.2} parent=11 // pred_check_branch
        %120 = sbr.rel (%p118) target = $region16
      $region15: #{conv_transpose_forward.2} parent=11 // pred_region
        _
      $region16: #{conv_transpose_forward.2} parent=11 // pred_fallthru
        _
      // Predicated region
      $region17: #{conv_transpose_forward.2} parent=11 // pred_check
        %p121 = pneg %p77
      $region18: #{conv_transpose_forward.2} parent=11 // pred_check_branch
        %123 = sbr.rel (%p121) target = $region20
      $region19: #{conv_transpose_forward.2} parent=11 // pred_region
        _
      $region20: #{conv_transpose_forward.2} parent=11 // pred_fallthru
        _
    $region12: #{conv_transpose_forward.2} parent=5 // pred_fallthru
      _
    %p124 = scmp.lt.s32.totalorder %s9, 4
    // Predicated region
    $region21: #{conv_transpose_forward.2} parent=5 // pred_check
      %p125 = pneg %p124
    $region22: #{conv_transpose_forward.2} parent=5 // pred_check_branch
      %127 = sbr.rel (%p125) target = $region24
    $region23: #{conv_transpose_forward.2} parent=5 // pred_region
      // Predicated region
      $region25: #{conv_transpose_forward.2} parent=23 // pred_check
        %p128 = pneg %p29
      $region26: #{conv_transpose_forward.2} parent=23 // pred_check_branch
        %130 = sbr.rel (%p128) target = $region28
      $region27: #{conv_transpose_forward.2} parent=23 // pred_region
        %p131 = scmp.lt.s32.totalorder %s9, 3
        %s132 = scalar_select %p131, %s9, 3
        %s133 = smul.addr %s132, 8
        %s134 = scalar_lea.vmem %s0, %s133
      $region28: #{conv_transpose_forward.2} parent=23 // pred_fallthru
        _
    $region24: #{conv_transpose_forward.2} parent=5 // pred_fallthru
      _
    %p135 = scmp.le.s32.totalorder 1, %s9
    %p136 = scmp.lt.s32.totalorder %s9, 5
    %p137 = pnand %p135, %p136
    %p138 = pneg %p137
    // Predicated region
    $region29: #{conv_transpose_forward.2} parent=5 // pred_check
      _
    $region30: #{conv_transpose_forward.2} parent=5 // pred_check_branch
      %140 = sbr.rel (%p137) target = $region32
    $region31: #{conv_transpose_forward.2} parent=5 // pred_region
      %s141 = ssub.s32 %s9, 1
      %p142 = scmp.lt.s32.totalorder %s14, 3
      %s143 = scalar_select %p142, %s14, 3
      %s144 = smul.addr %s143, 8
      %s145 = scalar_lea.vmem %s0, %s144
      %p146 = pneg %p35
      %p147 = pneg %p32
      %p148 = pneg %p56
      %p149 = pneg %p53
      %p150 = pneg %p77
      %p151 = pneg %p74
      %p152 = pneg %p103
      %p153 = pneg %p100
      %p154 = scmp.lt.s32.totalorder %s14, 3
      %s155 = scalar_select %p154, %s14, 3
      %s156 = smul.addr %s155, 4
      %s157 = smul.addr %s156, 8
      %s158 = scalar_lea.vmem %s3, %s157
      %p159 = scmp.lt.s32.totalorder %s14, 3
      %s160 = scalar_select %p159, %s14, 3
      %s161 = smul.addr %s160, 8
      %s162 = scalar_lea.vmem %s0, %s161
      %p163 = scmp.lt.s32.totalorder %s14, 3
      %s164 = scalar_select %p163, %s14, 3
      %s165 = smul.addr %s164, 4
      %s166 = smul.addr %s165, 8
      %s167 = scalar_lea.vmem %s3, %s166
      %v168 = vld [vmem:[%s162] sm:$0xff]
      %v169 = vld [vmem:[%s1] sm:$0xff]
      %v170 = vld [vmem:[%s1 + $0x8] sm:$0xff]
      %v171 = vld [vmem:[%s1 + $0x10] sm:$0xff]
      %v172 = vld [vmem:[%s1 + $0x18] sm:$0xff]
      %v173 = vld [vmem:[%s1 + $0x20] sm:$0xff]
      %v174 = vld [vmem:[%s1 + $0x28] sm:$0xff]
      %v175 = vld [vmem:[%s1 + $0x30] sm:$0xff]
      %v176 = vld [vmem:[%s1 + $0x38] sm:$0xff]
      %v177 = vld [vmem:[%s1 + $0x40] sm:$0xff]
      %v178 = vld [vmem:[%s1 + $0x48] sm:$0xff]
      %v179 = vld [vmem:[%s1 + $0x50] sm:$0xff]
      %v180 = vld [vmem:[%s1 + $0x58] sm:$0xff]
      %v181 = vld [vmem:[%s1 + $0x60] sm:$0xff]
      %v182 = vld [vmem:[%s1 + $0x68] sm:$0xff]
      %v183 = vld [vmem:[%s1 + $0x70] sm:$0xff]
      %v184 = vld [vmem:[%s1 + $0x78] sm:$0xff]
      %v185 = vld [vmem:[%s1 + $0x80] sm:$0xff]
      %v186 = vld [vmem:[%s1 + $0x88] sm:$0xff]
      %v187 = vld [vmem:[%s1 + $0x90] sm:$0xff]
      %v188 = vld [vmem:[%s1 + $0x98] sm:$0xff]
      %v189 = vld [vmem:[%s1 + $0xa0] sm:$0xff]
      %v190 = vld [vmem:[%s1 + $0xa8] sm:$0xff]
      %v191 = vld [vmem:[%s1 + $0xb0] sm:$0xff]
      %v192 = vld [vmem:[%s1 + $0xb8] sm:$0xff]
      %v193 = vld [vmem:[%s1 + $0xc0] sm:$0xff]
      %v194 = vld [vmem:[%s1 + $0xc8] sm:$0xff]
      %v195 = vld [vmem:[%s1 + $0xd0] sm:$0xff]
      %v196 = vld [vmem:[%s1 + $0xd8] sm:$0xff]
      %v197 = vld [vmem:[%s1 + $0xe0] sm:$0xff]
      %v198 = vld [vmem:[%s1 + $0xe8] sm:$0xff]
      %v199 = vld [vmem:[%s1 + $0xf0] sm:$0xff]
      %v200 = vld [vmem:[%s1 + $0xf8] sm:$0xff]
      %v201 = vld [vmem:[%s2] sm:$0xf]
      %v203 = vlaneseq
      %v204 = vshrl.u32 %v203, 7
      %v205 = vsub.s32 0, %v204
      %v206 = vrot.slane %v201, %v205
      %v207 = vlaneseq
      %v208 = vshrl.u32 %v207, 7
      %v209 = vsub.s32 1, %v208
      %v210 = vrot.slane %v201, %v209
      %v211 = vlaneseq
      %v212 = vshrl.u32 %v211, 7
      %v213 = vsub.s32 2, %v212
      %v214 = vrot.slane %v201, %v213
      %v215 = vlaneseq
      %v216 = vshrl.u32 %v215, 7
      %v217 = vsub.s32 3, %v216
      %v218 = vrot.slane %v201, %v217
      %vm223 = vcmask 523264
      %v225 = vsel %vm223, %v168, 0
      %227 = vmatprep.subr.mxu0 %v170
      %228 = vmatpush1.msra.mxu0 %v169
      %229 = vmatprep.subr.mxu0 %v174
      %230 = vmatpush1.msra.mxu0 %v173
      %231 = vmatprep.subr.mxu0 %v178
      %232 = vmatpush1.msra.mxu0 %v177
      %233 = vmatprep.subr.mxu0 %v182
      %234 = vmatpush1.msra.mxu0 %v181
      %235 = vmatprep.subr.mxu0 %v186
      %236 = vmatpush1.msra.mxu0 %v185
      %237 = vmatprep.subr.mxu0 %v190
      %238 = vmatpush1.msra.mxu0 %v189
      %239 = vmatprep.subr.mxu0 %v194
      %240 = vmatpush1.msra.mxu0 %v193
      %241 = vmatprep.subr.mxu0 %v198
      %242 = vmatpush1.msra.mxu0 %v197
      %243 = vmatprep.subr.mxu0 0.0
      %244 = vmatpush1.msra.mxu0 0.0
      %245 = vmatprep.subr.mxu0 0.0
      %246 = vmatpush1.msra.mxu0 0.0
      %247 = vmatprep.subr.mxu0 0.0
      %248 = vmatpush1.msra.mxu0 0.0
      %249 = vmatprep.subr.mxu0 0.0
      %250 = vmatpush1.msra.mxu0 0.0
      %251 = vmatprep.subr.mxu0 0.0
      %252 = vmatpush1.msra.mxu0 0.0
      %253 = vmatprep.subr.mxu0 0.0
      %254 = vmatpush1.msra.mxu0 0.0
      %255 = vmatprep.subr.mxu0 0.0
      %256 = vmatpush1.msra.mxu0 0.0
      %257 = vmatprep.subr.mxu0 0.0
      %258 = vmatpush1.msra.mxu0 0.0
      %259 = vmatprep.subr.mxu0 0.0
      %260 = vmatpush1.msra.mxu0 0.0
      %261 = vmatprep.subr.mxu0 0.0
      %262 = vmatpush1.msra.mxu0 0.0
      %263 = vmatprep.subr.mxu0 0.0
      %264 = vmatpush1.msra.mxu0 0.0
      %265 = vmatprep.subr.mxu0 0.0
      %266 = vmatpush1.msra.mxu0 0.0
      %267 = vmatprep.subr.mxu0 0.0
      %268 = vmatpush1.msra.mxu0 0.0
      %269 = vmatprep.subr.mxu0 0.0
      %270 = vmatpush1.msra.mxu0 0.0
      %271 = vmatprep.subr.mxu0 0.0
      %272 = vmatpush1.msra.mxu0 0.0
      %273 = vmatprep.subr.mxu0 0.0
      %274 = vmatpush1.msra.mxu0 0.0
      %275 = vmatprep.subr.mxu0 0.0
      %276 = vmatpush1.msra.mxu0 0.0
      %277 = vmatprep.subr.mxu0 0.0
      %278 = vmatpush1.msra.mxu0 0.0
      %279 = vmatprep.subr.mxu0 0.0
      %280 = vmatpush1.msra.mxu0 0.0
      %281 = vmatprep.subr.mxu0 0.0
      %282 = vmatpush1.msra.mxu0 0.0
      %283 = vmatprep.subr.mxu0 0.0
      %284 = vmatpush1.msra.mxu0 0.0
      %285 = vmatprep.subr.mxu0 0.0
      %286 = vmatpush1.msra.mxu0 0.0
      %287 = vmatprep.subr.mxu0 0.0
      %288 = vmatpush1.msra.mxu0 0.0
      %289 = vmatprep.subr.mxu0 0.0
      %290 = vmatpush1.msra.mxu0 0.0
      %291 = vmatprep.mubr.f32.mxu0 0.0
      %292 = vmatmul.mubr.f32.gmra.mrb[0].mxu0 %v225
      %v293 = vpop.f32.mrb[0].mxu0
      %v294 = vadd.f32 %v206, %v293
      %v295 = vpop.f32.mrb[0].mxu0
      %v296 = vadd.f32 %v210, %v295
      %297 = vdwg.mxu0
      %298 = vmatprep.subr.mxu0 %v172
      %299 = vmatpush1.msra.mxu0 %v171
      %300 = vmatprep.subr.mxu0 %v176
      %301 = vmatpush1.msra.mxu0 %v175
      %302 = vmatprep.subr.mxu0 %v180
      %303 = vmatpush1.msra.mxu0 %v179
      %304 = vmatprep.subr.mxu0 %v184
      %305 = vmatpush1.msra.mxu0 %v183
      %306 = vmatprep.subr.mxu0 %v188
      %307 = vmatpush1.msra.mxu0 %v187
      %308 = vmatprep.subr.mxu0 %v192
      %309 = vmatpush1.msra.mxu0 %v191
      %310 = vmatprep.subr.mxu0 %v196
      %311 = vmatpush1.msra.mxu0 %v195
      %312 = vmatprep.subr.mxu0 %v200
      %313 = vmatpush1.msra.mxu0 %v199
      %314 = vmatprep.subr.mxu0 0.0
      %315 = vmatpush1.msra.mxu0 0.0
      %316 = vmatprep.subr.mxu0 0.0
      %317 = vmatpush1.msra.mxu0 0.0
      %318 = vmatprep.subr.mxu0 0.0
      %319 = vmatpush1.msra.mxu0 0.0
      %320 = vmatprep.subr.mxu0 0.0
      %321 = vmatpush1.msra.mxu0 0.0
      %322 = vmatprep.subr.mxu0 0.0
      %323 = vmatpush1.msra.mxu0 0.0
      %324 = vmatprep.subr.mxu0 0.0
      %325 = vmatpush1.msra.mxu0 0.0
      %326 = vmatprep.subr.mxu0 0.0
      %327 = vmatpush1.msra.mxu0 0.0
      %328 = vmatprep.subr.mxu0 0.0
      %329 = vmatpush1.msra.mxu0 0.0
      %330 = vmatprep.subr.mxu0 0.0
      %331 = vmatpush1.msra.mxu0 0.0
      %332 = vmatprep.subr.mxu0 0.0
      %333 = vmatpush1.msra.mxu0 0.0
      %334 = vmatprep.subr.mxu0 0.0
      %335 = vmatpush1.msra.mxu0 0.0
      %336 = vmatprep.subr.mxu0 0.0
      %337 = vmatpush1.msra.mxu0 0.0
      %338 = vmatprep.subr.mxu0 0.0
      %339 = vmatpush1.msra.mxu0 0.0
      %340 = vmatprep.subr.mxu0 0.0
      %341 = vmatpush1.msra.mxu0 0.0
      %342 = vmatprep.subr.mxu0 0.0
      %343 = vmatpush1.msra.mxu0 0.0
      %344 = vmatprep.subr.mxu0 0.0
      %345 = vmatpush1.msra.mxu0 0.0
      %346 = vmatprep.subr.mxu0 0.0
      %347 = vmatpush1.msra.mxu0 0.0
      %348 = vmatprep.subr.mxu0 0.0
      %349 = vmatpush1.msra.mxu0 0.0
      %350 = vmatprep.subr.mxu0 0.0
      %351 = vmatpush1.msra.mxu0 0.0
      %352 = vmatprep.subr.mxu0 0.0
      %353 = vmatpush1.msra.mxu0 0.0
      %354 = vmatprep.subr.mxu0 0.0
      %355 = vmatpush1.msra.mxu0 0.0
      %356 = vmatprep.subr.mxu0 0.0
      %357 = vmatpush1.msra.mxu0 0.0
      %358 = vmatprep.subr.mxu0 0.0
      %359 = vmatpush1.msra.mxu0 0.0
      %360 = vmatprep.subr.mxu0 0.0
      %361 = vmatpush1.msra.mxu0 0.0
      %362 = vmatprep.mubr.f32.mxu0 0.0
      %363 = vmatmul.mubr.f32.gmra.mrb[0].mxu0 %v225
      %v364 = vpop.f32.mrb[0].mxu0
      %v365 = vadd.f32 %v214, %v364
      %v366 = vpop.f32.mrb[0].mxu0
      %v367 = vadd.f32 %v218, %v366
      %368 = vdwg.mxu0
      %v369 = vmax.f32 %v294, 0.0
      %v370 = vmax.f32 %v296, 0.0
      %v371 = vmax.f32 %v365, 0.0
      %v372 = vmax.f32 %v367, 0.0
      %v373 = vlaneseq
      %v374 = vshrl.u32 %v373, 7
      %vm375 = vcmp.eq.s32.totalorder %v374, 0
      %v376 = vsel %vm375, 1.0, 0.0
      %vm377 = vcmp.eq.s32.totalorder %v374, 1
      %v378 = vsel %vm377, 1.0, 0.0
      %v379 = vmul.f32 %v369, %v369
      %v380 = vmul.f32 %v370, %v370
      %v381 = vmul.f32 %v371, %v371
      %v382 = vmul.f32 %v372, %v372
      %vm383 = vcmask 64512
      %v385 = vsel %vm383, %v378, 0
      %387 = vmatprep.subr.mxu0 %v380
      %388 = vmatpush1.msra.mxu0 %v379
      %389 = vmatprep.subr.mxu0 0.0
      %390 = vmatpush1.msra.mxu0 0.0
      %391 = vmatprep.subr.mxu0 0.0
      %392 = vmatpush1.msra.mxu0 0.0
      %393 = vmatprep.subr.mxu0 0.0
      %394 = vmatpush1.msra.mxu0 0.0
      %395 = vmatprep.subr.mxu0 0.0
      %396 = vmatpush1.msra.mxu0 0.0
      %397 = vmatprep.subr.mxu0 0.0
      %398 = vmatpush1.msra.mxu0 0.0
      %399 = vmatprep.subr.mxu0 0.0
      %400 = vmatpush1.msra.mxu0 0.0
      %401 = vmatprep.subr.mxu0 0.0
      %402 = vmatpush1.msra.mxu0 0.0
      %403 = vmatprep.subr.mxu0 0.0
      %404 = vmatpush1.msra.mxu0 0.0
      %405 = vmatprep.subr.mxu0 0.0
      %406 = vmatpush1.msra.mxu0 0.0
      %407 = vmatprep.subr.mxu0 0.0
      %408 = vmatpush1.msra.mxu0 0.0
      %409 = vmatprep.subr.mxu0 0.0
      %410 = vmatpush1.msra.mxu0 0.0
      %411 = vmatprep.subr.mxu0 0.0
      %412 = vmatpush1.msra.mxu0 0.0
      %413 = vmatprep.subr.mxu0 0.0
      %414 = vmatpush1.msra.mxu0 0.0
      %415 = vmatprep.subr.mxu0 0.0
      %416 = vmatpush1.msra.mxu0 0.0
      %417 = vmatprep.subr.mxu0 0.0
      %418 = vmatpush1.msra.mxu0 0.0
      %419 = vmatprep.subr.mxu0 0.0
      %420 = vmatpush1.msra.mxu0 0.0
      %421 = vmatprep.subr.mxu0 0.0
      %422 = vmatpush1.msra.mxu0 0.0
      %423 = vmatprep.subr.mxu0 0.0
      %424 = vmatpush1.msra.mxu0 0.0
      %425 = vmatprep.subr.mxu0 0.0
      %426 = vmatpush1.msra.mxu0 0.0
      %427 = vmatprep.subr.mxu0 0.0
      %428 = vmatpush1.msra.mxu0 0.0
      %429 = vmatprep.subr.mxu0 0.0
      %430 = vmatpush1.msra.mxu0 0.0
      %431 = vmatprep.subr.mxu0 0.0
      %432 = vmatpush1.msra.mxu0 0.0
      %433 = vmatprep.subr.mxu0 0.0
      %434 = vmatpush1.msra.mxu0 0.0
      %435 = vmatprep.subr.mxu0 0.0
      %436 = vmatpush1.msra.mxu0 0.0
      %437 = vmatprep.subr.mxu0 0.0
      %438 = vmatpush1.msra.mxu0 0.0
      %439 = vmatprep.subr.mxu0 0.0
      %440 = vmatpush1.msra.mxu0 0.0
      %441 = vmatprep.subr.mxu0 0.0
      %442 = vmatpush1.msra.mxu0 0.0
      %443 = vmatprep.subr.mxu0 0.0
      %444 = vmatpush1.msra.mxu0 0.0
      %445 = vmatprep.subr.mxu0 0.0
      %446 = vmatpush1.msra.mxu0 0.0
      %447 = vmatprep.subr.mxu0 0.0
      %448 = vmatpush1.msra.mxu0 0.0
      %449 = vmatprep.subr.mxu0 0.0
      %450 = vmatpush1.msra.mxu0 0.0
      %451 = vmatprep.mubr.f32.mxu0 0.0
      %452 = vmatmul.mubr.f32.gmra.mrb[0].mxu0 %v385
      %v453 = vpop.f32.mrb[0].mxu0
      %v454 = vadd.f32 0.0, %v453
      %v455 = vpop.f32.mrb[0].mxu0
      %v456 = vadd.f32 0.0, %v455
      %457 = vdwg.mxu0
      %458 = vmatprep.subr.mxu0 %v382
      %459 = vmatpush1.msra.mxu0 %v381
      %460 = vmatprep.subr.mxu0 0.0
      %461 = vmatpush1.msra.mxu0 0.0
      %462 = vmatprep.subr.mxu0 0.0
      %463 = vmatpush1.msra.mxu0 0.0
      %464 = vmatprep.subr.mxu0 0.0
      %465 = vmatpush1.msra.mxu0 0.0
      %466 = vmatprep.subr.mxu0 0.0
      %467 = vmatpush1.msra.mxu0 0.0
      %468 = vmatprep.subr.mxu0 0.0
      %469 = vmatpush1.msra.mxu0 0.0
      %470 = vmatprep.subr.mxu0 0.0
      %471 = vmatpush1.msra.mxu0 0.0
      %472 = vmatprep.subr.mxu0 0.0
      %473 = vmatpush1.msra.mxu0 0.0
      %474 = vmatprep.subr.mxu0 0.0
      %475 = vmatpush1.msra.mxu0 0.0
      %476 = vmatprep.subr.mxu0 0.0
      %477 = vmatpush1.msra.mxu0 0.0
      %478 = vmatprep.subr.mxu0 0.0
      %479 = vmatpush1.msra.mxu0 0.0
      %480 = vmatprep.subr.mxu0 0.0
      %481 = vmatpush1.msra.mxu0 0.0
      %482 = vmatprep.subr.mxu0 0.0
      %483 = vmatpush1.msra.mxu0 0.0
      %484 = vmatprep.subr.mxu0 0.0
      %485 = vmatpush1.msra.mxu0 0.0
      %486 = vmatprep.subr.mxu0 0.0
      %487 = vmatpush1.msra.mxu0 0.0
      %488 = vmatprep.subr.mxu0 0.0
      %489 = vmatpush1.msra.mxu0 0.0
      %490 = vmatprep.subr.mxu0 0.0
      %491 = vmatpush1.msra.mxu0 0.0
      %492 = vmatprep.subr.mxu0 0.0
      %493 = vmatpush1.msra.mxu0 0.0
      %494 = vmatprep.subr.mxu0 0.0
      %495 = vmatpush1.msra.mxu0 0.0
      %496 = vmatprep.subr.mxu0 0.0
      %497 = vmatpush1.msra.mxu0 0.0
      %498 = vmatprep.subr.mxu0 0.0
      %499 = vmatpush1.msra.mxu0 0.0
      %500 = vmatprep.subr.mxu0 0.0
      %501 = vmatpush1.msra.mxu0 0.0
      %502 = vmatprep.subr.mxu0 0.0
      %503 = vmatpush1.msra.mxu0 0.0
      %504 = vmatprep.subr.mxu0 0.0
      %505 = vmatpush1.msra.mxu0 0.0
      %506 = vmatprep.subr.mxu0 0.0
      %507 = vmatpush1.msra.mxu0 0.0
      %508 = vmatprep.subr.mxu0 0.0
      %509 = vmatpush1.msra.mxu0 0.0
      %510 = vmatprep.subr.mxu0 0.0
      %511 = vmatpush1.msra.mxu0 0.0
      %512 = vmatprep.subr.mxu0 0.0
      %513 = vmatpush1.msra.mxu0 0.0
      %514 = vmatprep.subr.mxu0 0.0
      %515 = vmatpush1.msra.mxu0 0.0
      %516 = vmatprep.subr.mxu0 0.0
      %517 = vmatpush1.msra.mxu0 0.0
      %518 = vmatprep.subr.mxu0 0.0
      %519 = vmatpush1.msra.mxu0 0.0
      %520 = vmatprep.subr.mxu0 0.0
      %521 = vmatpush1.msra.mxu0 0.0
      %522 = vmatprep.mubr.f32.mxu0 0.0
      %523 = vmatmul.mubr.f32.gmra.mrb[0].mxu0 %v385
      %v524 = vpop.f32.mrb[0].mxu0
      %v525 = vadd.f32 0.0, %v524
      %v526 = vpop.f32.mrb[0].mxu0
      %v527 = vadd.f32 0.0, %v526
      %528 = vdwg.mxu0
      %v530 = vsel %vm383, %v376, 0
      %532 = vmatprep.subr.mxu0 %v370
      %533 = vmatpush1.msra.mxu0 %v369
      %534 = vmatprep.subr.mxu0 0.0
      %535 = vmatpush1.msra.mxu0 0.0
      %536 = vmatprep.subr.mxu0 0.0
      %537 = vmatpush1.msra.mxu0 0.0
      %538 = vmatprep.subr.mxu0 0.0
      %539 = vmatpush1.msra.mxu0 0.0
      %540 = vmatprep.subr.mxu0 0.0
      %541 = vmatpush1.msra.mxu0 0.0
      %542 = vmatprep.subr.mxu0 0.0
      %543 = vmatpush1.msra.mxu0 0.0
      %544 = vmatprep.subr.mxu0 0.0
      %545 = vmatpush1.msra.mxu0 0.0
      %546 = vmatprep.subr.mxu0 0.0
      %547 = vmatpush1.msra.mxu0 0.0
      %548 = vmatprep.subr.mxu0 0.0
      %549 = vmatpush1.msra.mxu0 0.0
      %550 = vmatprep.subr.mxu0 0.0
      %551 = vmatpush1.msra.mxu0 0.0
      %552 = vmatprep.subr.mxu0 0.0
      %553 = vmatpush1.msra.mxu0 0.0
      %554 = vmatprep.subr.mxu0 0.0
      %555 = vmatpush1.msra.mxu0 0.0
      %556 = vmatprep.subr.mxu0 0.0
      %557 = vmatpush1.msra.mxu0 0.0
      %558 = vmatprep.subr.mxu0 0.0
      %559 = vmatpush1.msra.mxu0 0.0
      %560 = vmatprep.subr.mxu0 0.0
      %561 = vmatpush1.msra.mxu0 0.0
      %562 = vmatprep.subr.mxu0 0.0
      %563 = vmatpush1.msra.mxu0 0.0
      %564 = vmatprep.subr.mxu0 0.0
      %565 = vmatpush1.msra.mxu0 0.0
      %566 = vmatprep.subr.mxu0 0.0
      %567 = vmatpush1.msra.mxu0 0.0
      %568 = vmatprep.subr.mxu0 0.0
      %569 = vmatpush1.msra.mxu0 0.0
      %570 = vmatprep.subr.mxu0 0.0
      %571 = vmatpush1.msra.mxu0 0.0
      %572 = vmatprep.subr.mxu0 0.0
      %573 = vmatpush1.msra.mxu0 0.0
      %574 = vmatprep.subr.mxu0 0.0
      %575 = vmatpush1.msra.mxu0 0.0
      %576 = vmatprep.subr.mxu0 0.0
      %577 = vmatpush1.msra.mxu0 0.0
      %578 = vmatprep.subr.mxu0 0.0
      %579 = vmatpush1.msra.mxu0 0.0
      %580 = vmatprep.subr.mxu0 0.0
      %581 = vmatpush1.msra.mxu0 0.0
      %582 = vmatprep.subr.mxu0 0.0
      %583 = vmatpush1.msra.mxu0 0.0
      %584 = vmatprep.subr.mxu0 0.0
      %585 = vmatpush1.msra.mxu0 0.0
      %586 = vmatprep.subr.mxu0 0.0
      %587 = vmatpush1.msra.mxu0 0.0
      %588 = vmatprep.subr.mxu0 0.0
      %589 = vmatpush1.msra.mxu0 0.0
      %590 = vmatprep.subr.mxu0 0.0
      %591 = vmatpush1.msra.mxu0 0.0
      %592 = vmatprep.subr.mxu0 0.0
      %593 = vmatpush1.msra.mxu0 0.0
      %594 = vmatprep.subr.mxu0 0.0
      %595 = vmatpush1.msra.mxu0 0.0
      %596 = vmatprep.mubr.f32.mxu0 0.0
      %597 = vmatmul.mubr.f32.gmra.mrb[0].mxu0 %v530
      %v598 = vpop.f32.mrb[0].mxu0
      %v599 = vadd.f32 %v454, %v598
      %v600 = vpop.f32.mrb[0].mxu0
      %v601 = vadd.f32 %v456, %v600
      %602 = vdwg.mxu0
      %603 = vmatprep.subr.mxu0 %v372
      %604 = vmatpush1.msra.mxu0 %v371
      %605 = vmatprep.subr.mxu0 0.0
      %606 = vmatpush1.msra.mxu0 0.0
      %607 = vmatprep.subr.mxu0 0.0
      %608 = vmatpush1.msra.mxu0 0.0
      %609 = vmatprep.subr.mxu0 0.0
      %610 = vmatpush1.msra.mxu0 0.0
      %611 = vmatprep.subr.mxu0 0.0
      %612 = vmatpush1.msra.mxu0 0.0
      %613 = vmatprep.subr.mxu0 0.0
      %614 = vmatpush1.msra.mxu0 0.0
      %615 = vmatprep.subr.mxu0 0.0
      %616 = vmatpush1.msra.mxu0 0.0
      %617 = vmatprep.subr.mxu0 0.0
      %618 = vmatpush1.msra.mxu0 0.0
      %619 = vmatprep.subr.mxu0 0.0
      %620 = vmatpush1.msra.mxu0 0.0
      %621 = vmatprep.subr.mxu0 0.0
      %622 = vmatpush1.msra.mxu0 0.0
      %623 = vmatprep.subr.mxu0 0.0
      %624 = vmatpush1.msra.mxu0 0.0
      %625 = vmatprep.subr.mxu0 0.0
      %626 = vmatpush1.msra.mxu0 0.0
      %627 = vmatprep.subr.mxu0 0.0
      %628 = vmatpush1.msra.mxu0 0.0
      %629 = vmatprep.subr.mxu0 0.0
      %630 = vmatpush1.msra.mxu0 0.0
      %631 = vmatprep.subr.mxu0 0.0
      %632 = vmatpush1.msra.mxu0 0.0
      %633 = vmatprep.subr.mxu0 0.0
      %634 = vmatpush1.msra.mxu0 0.0
      %635 = vmatprep.subr.mxu0 0.0
      %636 = vmatpush1.msra.mxu0 0.0
      %637 = vmatprep.subr.mxu0 0.0
      %638 = vmatpush1.msra.mxu0 0.0
      %639 = vmatprep.subr.mxu0 0.0
      %640 = vmatpush1.msra.mxu0 0.0
      %641 = vmatprep.subr.mxu0 0.0
      %642 = vmatpush1.msra.mxu0 0.0
      %643 = vmatprep.subr.mxu0 0.0
      %644 = vmatpush1.msra.mxu0 0.0
      %645 = vmatprep.subr.mxu0 0.0
      %646 = vmatpush1.msra.mxu0 0.0
      %647 = vmatprep.subr.mxu0 0.0
      %648 = vmatpush1.msra.mxu0 0.0
      %649 = vmatprep.subr.mxu0 0.0
      %650 = vmatpush1.msra.mxu0 0.0
      %651 = vmatprep.subr.mxu0 0.0
      %652 = vmatpush1.msra.mxu0 0.0
      %653 = vmatprep.subr.mxu0 0.0
      %654 = vmatpush1.msra.mxu0 0.0
      %655 = vmatprep.subr.mxu0 0.0
      %656 = vmatpush1.msra.mxu0 0.0
      %657 = vmatprep.subr.mxu0 0.0
      %658 = vmatpush1.msra.mxu0 0.0
      %659 = vmatprep.subr.mxu0 0.0
      %660 = vmatpush1.msra.mxu0 0.0
      %661 = vmatprep.subr.mxu0 0.0
      %662 = vmatpush1.msra.mxu0 0.0
      %663 = vmatprep.subr.mxu0 0.0
      %664 = vmatpush1.msra.mxu0 0.0
      %665 = vmatprep.subr.mxu0 0.0
      %666 = vmatpush1.msra.mxu0 0.0
      %667 = vmatprep.mubr.f32.mxu0 0.0
      %668 = vmatmul.mubr.f32.gmra.mrb[0].mxu0 %v530
      %v669 = vpop.f32.mrb[0].mxu0
      %v670 = vadd.f32 %v525, %v669
      %v671 = vpop.f32.mrb[0].mxu0
      %v672 = vadd.f32 %v527, %v671
      %673 = vdwg.mxu0
      %674 = vst [vmem:[%s167] sm:$0xff] %v599
      %675 = vst [vmem:[%s167 + $0x8] sm:$0xff] %v601
      %676 = vst [vmem:[%s167 + $0x10] sm:$0xff] %v670
      %677 = vst [vmem:[%s167 + $0x18] sm:$0xff] %v672
      %p678 = scmp.lt.s32.totalorder %s14, 3
      %s679 = scalar_select %p678, %s14, 3
      %s680 = smul.addr %s679, 4
      %s681 = smul.addr %s680, 8
      %s682 = scalar_lea.vmem %s3, %s681
      // Predicated region
      $region33: #{conv_transpose_forward.2} parent=31 // pred_check
        %p683 = pneg %p100
      $region34: #{conv_transpose_forward.2} parent=31 // pred_check_branch
        %685 = sbr.rel (%p683) target = $region36
      $region35: #{conv_transpose_forward.2} parent=31 // pred_region
        _
      $region36: #{conv_transpose_forward.2} parent=31 // pred_fallthru
        _
    $region32: #{conv_transpose_forward.2} parent=5 // pred_fallthru
      _
    %p686 = scmp.le.s32.totalorder 2, %s9
    // Predicated region
    $region37: #{conv_transpose_forward.2} parent=5 // pred_check
      %p687 = pneg %p686
    $region38: #{conv_transpose_forward.2} parent=5 // pred_check_branch
      %689 = sbr.rel (%p687) target = $region40
    $region39: #{conv_transpose_forward.2} parent=5 // pred_region
      %s690 = ssub.s32 %s9, 2
      // Predicated region
      $region41: #{conv_transpose_forward.2} parent=39 // pred_check
        %p691 = pneg %p106
      $region42: #{conv_transpose_forward.2} parent=39 // pred_check_branch
        %693 = sbr.rel (%p691) target = $region44
      $region43: #{conv_transpose_forward.2} parent=39 // pred_region
        %p694 = scmp.lt.s32.totalorder %s15, 3
        %s695 = scalar_select %p694, %s15, 3
        %s696 = smul.addr %s695, 4
        %s697 = smul.addr %s696, 8
        %s698 = scalar_lea.vmem %s3, %s697
      $region44: #{conv_transpose_forward.2} parent=39 // pred_fallthru
        _
    $region40: #{conv_transpose_forward.2} parent=5 // pred_fallthru
      _
  $region6: #{conv_transpose_forward.2} parent=0 // loop_footer
    %s13 = sadd.s32 1, %s9
  $region7: #{conv_transpose_forward.2} parent=0 // loop_footer_branch
    %8 = sbr.rel target = $region3
  $region8: #{conv_transpose_forward.2} parent=0 // loop_exit
    _

// kernel: conv_transpose_forward.3
$region0: #{conv_transpose_forward.3}
  #allocation0 [shape = 'u32[]', space=smem, size = 0x4, offset = 0x4, fixed_abs, tag = 'smem constant byte address 0x4 - core index']
  #allocation1 [shape = 'u32[144,128]{1,0:T(1,128)}', space=vmem, size = 0x12000, scoped, tag = 'internal scratch']
  %s0 = inlined_call_operand.vmem [shape: f32[32,64], index: 0, kind: input, shape index: {}]
  %s1 = inlined_call_operand.vmem [shape: f32[64,512], index: 1, kind: input, shape index: {}]
  %s2 = inlined_call_operand.vmem [shape: f32[3,512], index: 2, kind: input, shape index: {}]
  %s3 = inlined_call_operand.vmem [shape: f32[32,512], index: 3, kind: output, shape index: {}]
  %s4 = sld [smem:[#allocation0]]
  $region45: #{conv_transpose_forward.3} parent=0
    _
  %s6 = ssub.s32 1, %s4
  %s7 = scalar_select 0, %s6, %s4
  loop: start=0, step=1, limit=6
  $region2: #{conv_transpose_forward.3} parent=0 // loop_pre_header
    _
  $region3: #{conv_transpose_forward.3} parent=0 // loop_header
    %s9 = sphi 0, %s13
    %p10 = scmp.ge.s32.totalorder %s9, 6
    %s19 = sphi 0, %s21
    %s22 = sphi 0, %s19
    %s23 = sphi 0, %s22
    %s39 = sphi 0, %s23
    %s43 = sphi 0, %s43
    %s45 = sphi 0, %s43
    %s46 = sphi 0, %s45
    %s60 = sphi 0, %s46
    %s64 = sphi 0, %s64
    %s66 = sphi 0, %s64
    %s67 = sphi 0, %s66
    %s81 = sphi 0, %s67
    %s87 = sphi 0, %s89
    %s90 = sphi 0, %s87
    %s91 = sphi 0, %s90
    %s107 = sphi 0, %s91
  $region4: #{conv_transpose_forward.3} parent=0 // loop_header_branch
    %12 = sbr.rel (%p10) target = $region8
  $region5: #{conv_transpose_forward.3} parent=0 // loop_body
    %s14 = ssub.s32 %s9, 1
    %s15 = ssub.s32 %s9, 2
    %s16 = sadd.s32 %s9, 1
    %s17 = ssub.s32 %s9, %s16
    %p18 = scmp.eq.s32.totalorder %s17, 0
    %s20 = sadd.s32 %s19, 1
    %s21 = scalar_select %p18, %s19, %s20
    %p24 = pneg %p18
    %p25 = scmp.eq.s32.totalorder %s9, 3
    %p26 = por %p24, %p25
    %p27 = scmp.ne.s32.totalorder %s19, %s22
    %p28 = scmp.eq.s32.totalorder %s9, 0
    %p29 = por %p27, %p28
    %p30 = scmp.ne.s32.totalorder %s19, %s22
    %p31 = scmp.eq.s32.totalorder %s14, 3
    %p32 = por %p30, %p31
    %p33 = scmp.ne.s32.totalorder %s22, %s23
    %p34 = scmp.eq.s32.totalorder %s14, 0
    %p35 = por %p33, %p34
    %p36 = scmp.ne.s32.totalorder %s22, %s23
    %p37 = scmp.eq.s32.totalorder %s15, 3
    %p38 = por %p36, %p37
    %p40 = scmp.ne.s32.totalorder %s23, %s39
    %p41 = scmp.eq.s32.totalorder %s15, 0
    %p42 = por %p40, %p41
    %s44 = sadd.s32 %s43, 1
    %p47 = scmp.eq.s32.totalorder %s9, 3
    %p48 = scmp.ne.s32.totalorder %s43, %s45
    %p49 = scmp.eq.s32.totalorder %s9, 0
    %p50 = por %p48, %p49
    %p51 = scmp.ne.s32.totalorder %s43, %s45
    %p52 = scmp.eq.s32.totalorder %s14, 3
    %p53 = por %p51, %p52
    %p54 = scmp.ne.s32.totalorder %s45, %s46
    %p55 = scmp.eq.s32.totalorder %s14, 0
    %p56 = por %p54, %p55
    %p57 = scmp.ne.s32.totalorder %s45, %s46
    %p58 = scmp.eq.s32.totalorder %s15, 3
    %p59 = por %p57, %p58
    %p61 = scmp.ne.s32.totalorder %s46, %s60
    %p62 = scmp.eq.s32.totalorder %s15, 0
    %p63 = por %p61, %p62
    %s65 = sadd.s32 %s64, 1
    %p68 = scmp.eq.s32.totalorder %s9, 3
    %p69 = scmp.ne.s32.totalorder %s64, %s66
    %p70 = scmp.eq.s32.totalorder %s9, 0
    %p71 = por %p69, %p70
    %p72 = scmp.ne.s32.totalorder %s64, %s66
    %p73 = scmp.eq.s32.totalorder %s14, 3
    %p74 = por %p72, %p73
    %p75 = scmp.ne.s32.totalorder %s66, %s67
    %p76 = scmp.eq.s32.totalorder %s14, 0
    %p77 = por %p75, %p76
    %p78 = scmp.ne.s32.totalorder %s66, %s67
    %p79 = scmp.eq.s32.totalorder %s15, 3
    %p80 = por %p78, %p79
    %p82 = scmp.ne.s32.totalorder %s67, %s81
    %p83 = scmp.eq.s32.totalorder %s15, 0
    %p84 = por %p82, %p83
    %s85 = ssub.s32 %s9, %s16
    %p86 = scmp.eq.s32.totalorder %s85, 0
    %s88 = sadd.s32 %s87, 1
    %s89 = scalar_select %p86, %s87, %s88
    %p92 = pneg %p86
    %p93 = scmp.eq.s32.totalorder %s9, 3
    %p94 = por %p92, %p93
    %p95 = scmp.ne.s32.totalorder %s87, %s90
    %p96 = scmp.eq.s32.totalorder %s9, 0
    %p97 = por %p95, %p96
    %p98 = scmp.ne.s32.totalorder %s87, %s90
    %p99 = scmp.eq.s32.totalorder %s14, 3
    %p100 = por %p98, %p99
    %p101 = scmp.ne.s32.totalorder %s90, %s91
    %p102 = scmp.eq.s32.totalorder %s14, 0
    %p103 = por %p101, %p102
    %p104 = scmp.ne.s32.totalorder %s90, %s91
    %p105 = scmp.eq.s32.totalorder %s15, 3
    %p106 = por %p104, %p105
    %p108 = scmp.ne.s32.totalorder %s91, %s107
    %p109 = scmp.eq.s32.totalorder %s15, 0
    %p110 = por %p108, %p109
    %p111 = scmp.le.s32.totalorder 1, %s9
    %p112 = scmp.lt.s32.totalorder %s9, 5
    %p113 = pnand %p111, %p112
    %p114 = pneg %p113
    // Predicated region
    $region9: #{conv_transpose_forward.3} parent=5 // pred_check
      _
    $region10: #{conv_transpose_forward.3} parent=5 // pred_check_branch
      %116 = sbr.rel (%p113) target = $region12
    $region11: #{conv_transpose_forward.3} parent=5 // pred_region
      %s117 = ssub.s32 %s9, 1
      // Predicated region
      $region13: #{conv_transpose_forward.3} parent=11 // pred_check
        %p118 = pneg %p56
      $region14: #{conv_transpose_forward.3} parent=11 // pred_check_branch
        %120 = sbr.rel (%p118) target = $region16
      $region15: #{conv_transpose_forward.3} parent=11 // pred_region
        _
      $region16: #{conv_transpose_forward.3} parent=11 // pred_fallthru
        _
      // Predicated region
      $region17: #{conv_transpose_forward.3} parent=11 // pred_check
        %p121 = pneg %p77
      $region18: #{conv_transpose_forward.3} parent=11 // pred_check_branch
        %123 = sbr.rel (%p121) target = $region20
      $region19: #{conv_transpose_forward.3} parent=11 // pred_region
        _
      $region20: #{conv_transpose_forward.3} parent=11 // pred_fallthru
        _
    $region12: #{conv_transpose_forward.3} parent=5 // pred_fallthru
      _
    %p124 = scmp.lt.s32.totalorder %s9, 4
    // Predicated region
    $region21: #{conv_transpose_forward.3} parent=5 // pred_check
      %p125 = pneg %p124
    $region22: #{conv_transpose_forward.3} parent=5 // pred_check_branch
      %127 = sbr.rel (%p125) target = $region24
    $region23: #{conv_transpose_forward.3} parent=5 // pred_region
      // Predicated region
      $region25: #{conv_transpose_forward.3} parent=23 // pred_check
        %p128 = pneg %p29
      $region26: #{conv_transpose_forward.3} parent=23 // pred_check_branch
        %130 = sbr.rel (%p128) target = $region28
      $region27: #{conv_transpose_forward.3} parent=23 // pred_region
        %p131 = scmp.lt.s32.totalorder %s9, 3
        %s132 = scalar_select %p131, %s9, 3
        %s133 = smul.addr %s132, 8
        %s134 = scalar_lea.vmem %s0, %s133
      $region28: #{conv_transpose_forward.3} parent=23 // pred_fallthru
        _
    $region24: #{conv_transpose_forward.3} parent=5 // pred_fallthru
      _
    %p135 = scmp.le.s32.totalorder 1, %s9
    %p136 = scmp.lt.s32.totalorder %s9, 5
    %p137 = pnand %p135, %p136
    %p138 = pneg %p137
    // Predicated region
    $region29: #{conv_transpose_forward.3} parent=5 // pred_check
      _
    $region30: #{conv_transpose_forward.3} parent=5 // pred_check_branch
      %140 = sbr.rel (%p137) target = $region32
    $region31: #{conv_transpose_forward.3} parent=5 // pred_region
      %s141 = ssub.s32 %s9, 1
      %p142 = scmp.lt.s32.totalorder %s14, 3
      %s143 = scalar_select %p142, %s14, 3
      %s144 = smul.addr %s143, 8
      %s145 = scalar_lea.vmem %s0, %s144
      %p146 = pneg %p35
      %p147 = pneg %p32
      %p148 = pneg %p56
      %p149 = pneg %p53
      %p150 = pneg %p77
      %p151 = pneg %p74
      %p152 = pneg %p103
      %p153 = pneg %p100
      %p154 = scmp.lt.s32.totalorder %s14, 3
      %s155 = scalar_select %p154, %s14, 3
      %s156 = smul.addr %s155, 4
      %s157 = smul.addr %s156, 8
      %s158 = scalar_lea.vmem %s3, %s157
      %p159 = scmp.lt.s32.totalorder %s14, 3
      %s160 = scalar_select %p159, %s14, 3
      %s161 = smul.addr %s160, 8
      %s162 = scalar_lea.vmem %s0, %s161
      %p163 = scmp.lt.s32.totalorder %s14, 3
      %s164 = scalar_select %p163, %s14, 3
      %s165 = smul.addr %s164, 4
      %s166 = smul.addr %s165, 8
      %s167 = scalar_lea.vmem %s3, %s166
      %v168 = vld [vmem:[%s162] sm:$0xff]
      %v169 = vld [vmem:[%s1] sm:$0xff]
      %v170 = vld [vmem:[%s1 + $0x8] sm:$0xff]
      %v171 = vld [vmem:[%s1 + $0x10] sm:$0xff]
      %v172 = vld [vmem:[%s1 + $0x18] sm:$0xff]
      %v173 = vld [vmem:[%s1 + $0x20] sm:$0xff]
      %v174 = vld [vmem:[%s1 + $0x28] sm:$0xff]
      %v175 = vld [vmem:[%s1 + $0x30] sm:$0xff]
      %v176 = vld [vmem:[%s1 + $0x38] sm:$0xff]
      %v177 = vld [vmem:[%s1 + $0x40] sm:$0xff]
      %v178 = vld [vmem:[%s1 + $0x48] sm:$0xff]
      %v179 = vld [vmem:[%s1 + $0x50] sm:$0xff]
      %v180 = vld [vmem:[%s1 + $0x58] sm:$0xff]
      %v181 = vld [vmem:[%s1 + $0x60] sm:$0xff]
      %v182 = vld [vmem:[%s1 + $0x68] sm:$0xff]
      %v183 = vld [vmem:[%s1 + $0x70] sm:$0xff]
      %v184 = vld [vmem:[%s1 + $0x78] sm:$0xff]
      %v185 = vld [vmem:[%s1 + $0x80] sm:$0xff]
      %v186 = vld [vmem:[%s1 + $0x88] sm:$0xff]
      %v187 = vld [vmem:[%s1 + $0x90] sm:$0xff]
      %v188 = vld [vmem:[%s1 + $0x98] sm:$0xff]
      %v189 = vld [vmem:[%s1 + $0xa0] sm:$0xff]
      %v190 = vld [vmem:[%s1 + $0xa8] sm:$0xff]
      %v191 = vld [vmem:[%s1 + $0xb0] sm:$0xff]
      %v192 = vld [vmem:[%s1 + $0xb8] sm:$0xff]
      %v193 = vld [vmem:[%s1 + $0xc0] sm:$0xff]
      %v194 = vld [vmem:[%s1 + $0xc8] sm:$0xff]
      %v195 = vld [vmem:[%s1 + $0xd0] sm:$0xff]
      %v196 = vld [vmem:[%s1 + $0xd8] sm:$0xff]
      %v197 = vld [vmem:[%s1 + $0xe0] sm:$0xff]
      %v198 = vld [vmem:[%s1 + $0xe8] sm:$0xff]
      %v199 = vld [vmem:[%s1 + $0xf0] sm:$0xff]
      %v200 = vld [vmem:[%s1 + $0xf8] sm:$0xff]
      %v201 = vld [vmem:[%s2] ss:$4 sm:$0xf]
      %v203 = vlaneseq
      %v204 = vshrl.u32 %v203, 7
      %v205 = vsub.s32 0, %v204
      %v206 = vrot.slane %v201, %v205
      %v207 = vlaneseq
      %v208 = vshrl.u32 %v207, 7
      %v209 = vsub.s32 1, %v208
      %v210 = vrot.slane %v201, %v209
      %v211 = vlaneseq
      %v212 = vshrl.u32 %v211, 7
      %v213 = vsub.s32 2, %v212
      %v214 = vrot.slane %v201, %v213
      %v215 = vlaneseq
      %v216 = vshrl.u32 %v215, 7
      %v217 = vsub.s32 3, %v216
      %v218 = vrot.slane %v201, %v217
      %vm223 = vcmask 523264
      %v225 = vsel %vm223, %v168, 0
      %227 = vmatprep.subr.mxu0 %v170
      %228 = vmatpush1.msra.mxu0 %v169
      %229 = vmatprep.subr.mxu0 %v174
      %230 = vmatpush1.msra.mxu0 %v173
      %231 = vmatprep.subr.mxu0 %v178
      %232 = vmatpush1.msra.mxu0 %v177
      %233 = vmatprep.subr.mxu0 %v182
      %234 = vmatpush1.msra.mxu0 %v181
      %235 = vmatprep.subr.mxu0 %v186
      %236 = vmatpush1.msra.mxu0 %v185
      %237 = vmatprep.subr.mxu0 %v190
      %238 = vmatpush1.msra.mxu0 %v189
      %239 = vmatprep.subr.mxu0 %v194
      %240 = vmatpush1.msra.mxu0 %v193
      %241 = vmatprep.subr.mxu0 %v198
      %242 = vmatpush1.msra.mxu0 %v197
      %243 = vmatprep.subr.mxu0 0.0
      %244 = vmatpush1.msra.mxu0 0.0
      %245 = vmatprep.subr.mxu0 0.0
      %246 = vmatpush1.msra.mxu0 0.0
      %247 = vmatprep.subr.mxu0 0.0
      %248 = vmatpush1.msra.mxu0 0.0
      %249 = vmatprep.subr.mxu0 0.0
      %250 = vmatpush1.msra.mxu0 0.0
      %251 = vmatprep.subr.mxu0 0.0
      %252 = vmatpush1.msra.mxu0 0.0
      %253 = vmatprep.subr.mxu0 0.0
      %254 = vmatpush1.msra.mxu0 0.0
      %255 = vmatprep.subr.mxu0 0.0
      %256 = vmatpush1.msra.mxu0 0.0
      %257 = vmatprep.subr.mxu0 0.0
      %258 = vmatpush1.msra.mxu0 0.0
      %259 = vmatprep.subr.mxu0 0.0
      %260 = vmatpush1.msra.mxu0 0.0
      %261 = vmatprep.subr.mxu0 0.0
      %262 = vmatpush1.msra.mxu0 0.0
      %263 = vmatprep.subr.mxu0 0.0
      %264 = vmatpush1.msra.mxu0 0.0
      %265 = vmatprep.subr.mxu0 0.0
      %266 = vmatpush1.msra.mxu0 0.0
      %267 = vmatprep.subr.mxu0 0.0
      %268 = vmatpush1.msra.mxu0 0.0
      %269 = vmatprep.subr.mxu0 0.0
      %270 = vmatpush1.msra.mxu0 0.0
      %271 = vmatprep.subr.mxu0 0.0
      %272 = vmatpush1.msra.mxu0 0.0
      %273 = vmatprep.subr.mxu0 0.0
      %274 = vmatpush1.msra.mxu0 0.0
      %275 = vmatprep.subr.mxu0 0.0
      %276 = vmatpush1.msra.mxu0 0.0
      %277 = vmatprep.subr.mxu0 0.0
      %278 = vmatpush1.msra.mxu0 0.0
      %279 = vmatprep.subr.mxu0 0.0
      %280 = vmatpush1.msra.mxu0 0.0
      %281 = vmatprep.subr.mxu0 0.0
      %282 = vmatpush1.msra.mxu0 0.0
      %283 = vmatprep.subr.mxu0 0.0
      %284 = vmatpush1.msra.mxu0 0.0
      %285 = vmatprep.subr.mxu0 0.0
      %286 = vmatpush1.msra.mxu0 0.0
      %287 = vmatprep.subr.mxu0 0.0
      %288 = vmatpush1.msra.mxu0 0.0
      %289 = vmatprep.subr.mxu0 0.0
      %290 = vmatpush1.msra.mxu0 0.0
      %291 = vmatprep.mubr.f32.mxu0 0.0
      %292 = vmatmul.mubr.f32.gmra.mrb[0].mxu0 %v225
      %v293 = vpop.f32.mrb[0].mxu0
      %v294 = vadd.f32 %v206, %v293
      %v295 = vpop.f32.mrb[0].mxu0
      %v296 = vadd.f32 %v210, %v295
      %297 = vdwg.mxu0
      %298 = vmatprep.subr.mxu0 %v172
      %299 = vmatpush1.msra.mxu0 %v171
      %300 = vmatprep.subr.mxu0 %v176
      %301 = vmatpush1.msra.mxu0 %v175
      %302 = vmatprep.subr.mxu0 %v180
      %303 = vmatpush1.msra.mxu0 %v179
      %304 = vmatprep.subr.mxu0 %v184
      %305 = vmatpush1.msra.mxu0 %v183
      %306 = vmatprep.subr.mxu0 %v188
      %307 = vmatpush1.msra.mxu0 %v187
      %308 = vmatprep.subr.mxu0 %v192
      %309 = vmatpush1.msra.mxu0 %v191
      %310 = vmatprep.subr.mxu0 %v196
      %311 = vmatpush1.msra.mxu0 %v195
      %312 = vmatprep.subr.mxu0 %v200
      %313 = vmatpush1.msra.mxu0 %v199
      %314 = vmatprep.subr.mxu0 0.0
      %315 = vmatpush1.msra.mxu0 0.0
      %316 = vmatprep.subr.mxu0 0.0
      %317 = vmatpush1.msra.mxu0 0.0
      %318 = vmatprep.subr.mxu0 0.0
      %319 = vmatpush1.msra.mxu0 0.0
      %320 = vmatprep.subr.mxu0 0.0
      %321 = vmatpush1.msra.mxu0 0.0
      %322 = vmatprep.subr.mxu0 0.0
      %323 = vmatpush1.msra.mxu0 0.0
      %324 = vmatprep.subr.mxu0 0.0
      %325 = vmatpush1.msra.mxu0 0.0
      %326 = vmatprep.subr.mxu0 0.0
      %327 = vmatpush1.msra.mxu0 0.0
      %328 = vmatprep.subr.mxu0 0.0
      %329 = vmatpush1.msra.mxu0 0.0
      %330 = vmatprep.subr.mxu0 0.0
      %331 = vmatpush1.msra.mxu0 0.0
      %332 = vmatprep.subr.mxu0 0.0
      %333 = vmatpush1.msra.mxu0 0.0
      %334 = vmatprep.subr.mxu0 0.0
      %335 = vmatpush1.msra.mxu0 0.0
      %336 = vmatprep.subr.mxu0 0.0
      %337 = vmatpush1.msra.mxu0 0.0
      %338 = vmatprep.subr.mxu0 0.0
      %339 = vmatpush1.msra.mxu0 0.0
      %340 = vmatprep.subr.mxu0 0.0
      %341 = vmatpush1.msra.mxu0 0.0
      %342 = vmatprep.subr.mxu0 0.0
      %343 = vmatpush1.msra.mxu0 0.0
      %344 = vmatprep.subr.mxu0 0.0
      %345 = vmatpush1.msra.mxu0 0.0
      %346 = vmatprep.subr.mxu0 0.0
      %347 = vmatpush1.msra.mxu0 0.0
      %348 = vmatprep.subr.mxu0 0.0
      %349 = vmatpush1.msra.mxu0 0.0
      %350 = vmatprep.subr.mxu0 0.0
      %351 = vmatpush1.msra.mxu0 0.0
      %352 = vmatprep.subr.mxu0 0.0
      %353 = vmatpush1.msra.mxu0 0.0
      %354 = vmatprep.subr.mxu0 0.0
      %355 = vmatpush1.msra.mxu0 0.0
      %356 = vmatprep.subr.mxu0 0.0
      %357 = vmatpush1.msra.mxu0 0.0
      %358 = vmatprep.subr.mxu0 0.0
      %359 = vmatpush1.msra.mxu0 0.0
      %360 = vmatprep.subr.mxu0 0.0
      %361 = vmatpush1.msra.mxu0 0.0
      %362 = vmatprep.mubr.f32.mxu0 0.0
      %363 = vmatmul.mubr.f32.gmra.mrb[0].mxu0 %v225
      %v364 = vpop.f32.mrb[0].mxu0
      %v365 = vadd.f32 %v214, %v364
      %v366 = vpop.f32.mrb[0].mxu0
      %v367 = vadd.f32 %v218, %v366
      %368 = vdwg.mxu0
      %v369 = vmax.f32 %v294, 0.0
      %v370 = vmax.f32 %v296, 0.0
      %v371 = vmax.f32 %v365, 0.0
      %v372 = vmax.f32 %v367, 0.0
      %s373 = scalar_lea.vmem %s2, 1
      %v374 = vld [vmem:[%s373] ss:$4 sm:$0xf]
      %v376 = vlaneseq
      %v377 = vshrl.u32 %v376, 7
      %v378 = vsub.s32 0, %v377
      %v379 = vrot.slane %v374, %v378
      %v380 = vlaneseq
      %v381 = vshrl.u32 %v380, 7
      %v382 = vsub.s32 1, %v381
      %v383 = vrot.slane %v374, %v382
      %v384 = vlaneseq
      %v385 = vshrl.u32 %v384, 7
      %v386 = vsub.s32 2, %v385
      %v387 = vrot.slane %v374, %v386
      %v388 = vlaneseq
      %v389 = vshrl.u32 %v388, 7
      %v390 = vsub.s32 3, %v389
      %v391 = vrot.slane %v374, %v390
      %v396 = vmul.f32 %v369, %v379
      %v397 = vmul.f32 %v370, %v383
      %v398 = vmul.f32 %v371, %v387
      %v399 = vmul.f32 %v372, %v391
      %s400 = scalar_lea.vmem %s2, 2
      %v401 = vld [vmem:[%s400] ss:$4 sm:$0xf]
      %v403 = vlaneseq
      %v404 = vshrl.u32 %v403, 7
      %v405 = vsub.s32 0, %v404
      %v406 = vrot.slane %v401, %v405
      %v407 = vlaneseq
      %v408 = vshrl.u32 %v407, 7
      %v409 = vsub.s32 1, %v408
      %v410 = vrot.slane %v401, %v409
      %v411 = vlaneseq
      %v412 = vshrl.u32 %v411, 7
      %v413 = vsub.s32 2, %v412
      %v414 = vrot.slane %v401, %v413
      %v415 = vlaneseq
      %v416 = vshrl.u32 %v415, 7
      %v417 = vsub.s32 3, %v416
      %v418 = vrot.slane %v401, %v417
      %v423 = vadd.f32 %v396, %v406
      %v424 = vadd.f32 %v397, %v410
      %v425 = vadd.f32 %v398, %v414
      %v426 = vadd.f32 %v399, %v418
      %427 = vst [vmem:[%s167] sm:$0xff] %v423
      %428 = vst [vmem:[%s167 + $0x8] sm:$0xff] %v424
      %429 = vst [vmem:[%s167 + $0x10] sm:$0xff] %v425
      %430 = vst [vmem:[%s167 + $0x18] sm:$0xff] %v426
      %p431 = scmp.lt.s32.totalorder %s14, 3
      %s432 = scalar_select %p431, %s14, 3
      %s433 = smul.addr %s432, 4
      %s434 = smul.addr %s433, 8
      %s435 = scalar_lea.vmem %s3, %s434
      // Predicated region
      $region33: #{conv_transpose_forward.3} parent=31 // pred_check
        %p436 = pneg %p100
      $region34: #{conv_transpose_forward.3} parent=31 // pred_check_branch
        %438 = sbr.rel (%p436) target = $region36
      $region35: #{conv_transpose_forward.3} parent=31 // pred_region
        _
      $region36: #{conv_transpose_forward.3} parent=31 // pred_fallthru
        _
    $region32: #{conv_transpose_forward.3} parent=5 // pred_fallthru
      _
    %p439 = scmp.le.s32.totalorder 2, %s9
    // Predicated region
    $region37: #{conv_transpose_forward.3} parent=5 // pred_check
      %p440 = pneg %p439
    $region38: #{conv_transpose_forward.3} parent=5 // pred_check_branch
      %442 = sbr.rel (%p440) target = $region40
    $region39: #{conv_transpose_forward.3} parent=5 // pred_region
      %s443 = ssub.s32 %s9, 2
      // Predicated region
      $region41: #{conv_transpose_forward.3} parent=39 // pred_check
        %p444 = pneg %p106
      $region42: #{conv_transpose_forward.3} parent=39 // pred_check_branch
        %446 = sbr.rel (%p444) target = $region44
      $region43: #{conv_transpose_forward.3} parent=39 // pred_region
        %p447 = scmp.lt.s32.totalorder %s15, 3
        %s448 = scalar_select %p447, %s15, 3
        %s449 = smul.addr %s448, 4
        %s450 = smul.addr %s449, 8
        %s451 = scalar_lea.vmem %s3, %s450
      $region44: #{conv_transpose_forward.3} parent=39 // pred_fallthru
        _
    $region40: #{conv_transpose_forward.3} parent=5 // pred_fallthru
      _
  $region6: #{conv_transpose_forward.3} parent=0 // loop_footer
    %s13 = sadd.s32 1, %s9
  $region7: #{conv_transpose_forward.3} parent=0 // loop_footer_branch
    %8 = sbr.rel target = $region3
  $region8: #{conv_transpose_forward.3} parent=0 // loop_exit
    _

</llo_original>
